<compile_context>
chip_gen: v7x
topology: tpu7x:2x2x1
jax: 0.10.0
libtpu: 0.0.40
codegen_flags: <defaults>
</compile_context>

<pallas_src>
import jax
import jax.numpy as jnp
from jax.experimental import pallas as pl
from jax.experimental.pallas import tpu as pltpu


def _attn_c1_kernel(x_ref, w1_ref, b1_ref, w2t_ref, a_ref):
    # x_ref:  (tm, L)  f32 row tile of instances (cast to bf16 in-kernel)
    # w1_ref: (L, D)   bf16, resident
    # b1_ref: (1, D)   f32
    # w2t_ref:(1, D)   f32 (transposed single output column of the 2nd Linear)
    # a_ref:  (tm, 1)  f32 attention logits (bias b2 added in the wrapper)
    xb = x_ref[...].astype(w1_ref.dtype)                 # VPU cast, hidden under DMA
    h = jnp.dot(xb, w1_ref[...], preferred_element_type=jnp.float32)
    h = jnp.tanh(h + b1_ref[...])                        # f32 VPU add + EUP tanh
    # Second Linear (D -> 1) as a lane reduction on the VPU/XLU (frees the MXU).
    a = jnp.sum(h * w2t_ref[...], axis=-1, keepdims=True)
    a_ref[...] = a.astype(a_ref.dtype)


def _attn_mc_kernel(x_ref, w1_ref, b1_ref, w2_ref, a_ref):
    # Multi-class path; class dim pre-padded to a multiple of 128 (lane-dense).
    xb = x_ref[...].astype(w1_ref.dtype)
    h = jnp.dot(xb, w1_ref[...], preferred_element_type=jnp.float32)
    h = jnp.tanh(h + b1_ref[...])                        # f32 elementwise
    a = jnp.dot(h.astype(w2_ref.dtype), w2_ref[...],
                preferred_element_type=jnp.float32)
    a_ref[...] = a.astype(a_ref.dtype)


def _round_up(n, m):
    return -(-n // m) * m


def attn_net_forward(x, w1, b1, w2, b2, *, tm=512, use_bf16=True):
    """Pallas Attn_Net.forward.

    x:[N,L], w1:[L,D], b1:[D] or [1,D], w2:[D,C], b2:[C] or [1,C].
    Returns (A[N,C], x) exactly like the PyTorch module.
    """
    N, L = x.shape
    D = w1.shape[1]
    C = w2.shape[1]

    # Row tile: large (fills MXU, amortizes per-step overhead), capped at
    # ceil(N/2) rounded to 16 so the grid has >= 2 steps and packed layouts
    # stay sublane-aligned.
    tm_eff = max(16, min(tm, _round_up(pl.cdiv(N, 2), 16)))
    grid = (pl.cdiv(N, tm_eff),)                          # ragged last tile OK

    mm_dtype = jnp.bfloat16 if use_bf16 else jnp.float32
    w1_k = w1.astype(mm_dtype)                            # tiny one-time cast
    b1_k = b1.reshape(1, D).astype(jnp.float32)

    cparams = pltpu.CompilerParams(dimension_semantics=("parallel",))

    if C == 1:
        w2t = w2.reshape(1, D).astype(jnp.float32)        # keep 2nd-layer weight f32
        a = pl.pallas_call(
            _attn_c1_kernel,
            out_shape=jax.ShapeDtypeStruct((N, 1), jnp.float32),
            grid_spec=pltpu.PrefetchScalarGridSpec(
                num_scalar_prefetch=0,
                grid=grid,
                in_specs=[
                    pl.BlockSpec((tm_eff, L), lambda i: (i, 0)),  # x row tile (f32)
                    pl.BlockSpec((L, D), lambda i: (0, 0)),       # W1 (resident)
                    pl.BlockSpec((1, D), lambda i: (0, 0)),       # b1
                    pl.BlockSpec((1, D), lambda i: (0, 0)),       # w2 column^T
                ],
                out_specs=pl.BlockSpec((tm_eff, 1), lambda i: (i, 0)),
            ),
            compiler_params=cparams,
        )(x, w1_k, b1_k, w2t)
    else:
        C_pad = _round_up(C, 128)                         # lane-dense output block
        w2_k = jnp.zeros((D, C_pad), mm_dtype).at[:, :C].set(w2.astype(mm_dtype))
        a = pl.pallas_call(
            _attn_mc_kernel,
            out_shape=jax.ShapeDtypeStruct((N, C_pad), jnp.float32),
            grid_spec=pltpu.PrefetchScalarGridSpec(
                num_scalar_prefetch=0,
                grid=grid,
                in_specs=[
                    pl.BlockSpec((tm_eff, L), lambda i: (i, 0)),
                    pl.BlockSpec((L, D), lambda i: (0, 0)),
                    pl.BlockSpec((1, D), lambda i: (0, 0)),
                    pl.BlockSpec((D, C_pad), lambda i: (0, 0)),
                ],
                out_specs=pl.BlockSpec((tm_eff, C_pad), lambda i: (i, 0)),
            ),
            compiler_params=cparams,
        )(x, w1_k, b1_k, w2_k)
        a = a[:, :C]

    # b2 add kept outside the kernel (tiny (N, C) op; avoids padded (1,1) tile).
    a = a + b2.reshape(1, C).astype(jnp.float32)
    # Attn_Net.forward returns the attention scores AND the untouched input.
    return a.astype(x.dtype), x


def init_params(key, L, D, n_classes, dtype=jnp.float32):
    """Deterministic synthetic init (nn.Linear-like shapes, weights pre-transposed)."""
    k1, k2, k3, k4 = jax.random.split(key, 4)
    w1 = (jax.random.uniform(k1, (L, D), dtype) - 0.5) * (2.0 / jnp.sqrt(L))
    b1 = (jax.random.uniform(k2, (D,), dtype) - 0.5) * (2.0 / jnp.sqrt(L))
    w2 = (jax.random.uniform(k3, (D, n_classes), dtype) - 0.5) * (2.0 / jnp.sqrt(D))
    b2 = (jax.random.uniform(k4, (n_classes,), dtype) - 0.5) * (2.0 / jnp.sqrt(D))
    return w1, b1, w2, b2


if __name__ == "__main__":
    L, D = 1024, 256
    key = jax.random.PRNGKey(0)
    kx, kp, kx2, kp2 = jax.random.split(key, 4)
    HI = jax.lax.Precision.HIGHEST

    # --- default module config: n_classes=1, small MIL bag of 100 instances ---
    N, C = 100, 1
    x = jax.random.normal(kx, (N, L), jnp.float32)
    w1, b1, w2, b2 = init_params(kp, L, D, C)
    a, x_out = attn_net_forward(x, w1, b1, w2, b2)
    jax.block_until_ready((a, x_out))

    # Reference: same math with the same bf16 rounding, f32 accumulation.
    xb = x.astype(jnp.bfloat16).astype(jnp.float32)
    w1r = w1.astype(jnp.bfloat16).astype(jnp.float32)
    h_ref = jnp.tanh(jnp.dot(xb, w1r, precision=HI) + b1[None, :])
    a_ref = jnp.dot(h_ref, w2, precision=HI) + b2[None, :]
    assert a.shape == (N, C) and x_out.shape == (N, L)
    assert jnp.array_equal(x_out, x)
    err1 = float(jnp.max(jnp.abs(a - a_ref)))
    assert jnp.allclose(a, a_ref, atol=2e-2, rtol=2e-2), err1

    # --- multi-class path (n_classes=3) exercises the padded lane-dense matmul ---
    N2, C2 = 40, 3
    x2 = jax.random.normal(kx2, (N2, L), jnp.float32)
    w1_2, b1_2, w2_2, b2_2 = init_params(kp2, L, D, C2)
    a2, x2_out = attn_net_forward(x2, w1_2, b1_2, w2_2, b2_2)
    jax.block_until_ready((a2, x2_out))

    x2b = x2.astype(jnp.bfloat16).astype(jnp.float32)
    w1_2r = w1_2.astype(jnp.bfloat16).astype(jnp.float32)
    w2_2r = w2_2.astype(jnp.bfloat16).astype(jnp.float32)
    h2_ref = jnp.tanh(jnp.dot(x2b, w1_2r, precision=HI) + b1_2[None, :])
    a2_ref = jnp.dot(h2_ref, w2_2r, precision=HI) + b2_2[None, :]
    assert a2.shape == (N2, C2) and jnp.array_equal(x2_out, x2)
    err2 = float(jnp.max(jnp.abs(a2 - a2_ref)))
    assert jnp.allclose(a2, a2_ref, atol=2e-2, rtol=2e-2), err2

    print("KERNEL_OK")
</pallas_src>

<mosaic_0001>
module attributes {stable_mosaic.version = 11 : i64} {
  func.func @_attn_c1_kernel(%arg0: i32, %arg1: memref<64x1024xf32, #tpu.memory_space<vmem>>, %arg2: memref<1024x256xbf16, #tpu.memory_space<vmem>>, %arg3: memref<1x256xf32, #tpu.memory_space<vmem>>, %arg4: memref<1x256xf32, #tpu.memory_space<vmem>>, %arg5: memref<64x1xf32, #tpu.memory_space<vmem>>) attributes {dimension_semantics = [#tpu.dimension_semantics<parallel>], iteration_bounds = array<i64: 2>, scalar_prefetch = 0 : i64, scratch_operands = 0 : i64, tpu.core_type = #tpu.core_type<tc>, window_params = [{transform_indices = @transform_0, window_bounds = array<i64: 64, 1024>}, {pipeline_mode = #tpu.pipeline_mode<synchronous>, transform_indices = @transform_1, window_bounds = array<i64: 1024, 256>}, {pipeline_mode = #tpu.pipeline_mode<synchronous>, transform_indices = @transform_2, window_bounds = array<i64: 1, 256>}, {pipeline_mode = #tpu.pipeline_mode<synchronous>, transform_indices = @transform_3, window_bounds = array<i64: 1, 256>}, {transform_indices = @transform_4, window_bounds = array<i64: 64, 1>}]} {
    %c0 = arith.constant 0 : index
    %c0_0 = arith.constant 0 : index
    %0 = vector.load %arg1[%c0, %c0_0] : memref<64x1024xf32, #tpu.memory_space<vmem>>, vector<64x1024xf32>
    %1 = arith.truncf %0 : vector<64x1024xf32> to vector<64x1024xbf16>
    %c0_1 = arith.constant 0 : index
    %c0_2 = arith.constant 0 : index
    %2 = vector.load %arg2[%c0_1, %c0_2] : memref<1024x256xbf16, #tpu.memory_space<vmem>>, vector<1024x256xbf16>
    %cst = arith.constant dense<0.000000e+00> : vector<64x256xf32>
    %3 = tpu.matmul %1, %2, %cst {dimension_numbers = #tpu.dot_dimension_numbers<[1], [0], [0], [1], [0, 0, 1, 1], [], []>} : vector<64x1024xbf16>, vector<1024x256xbf16>, vector<64x256xf32> -> vector<64x256xf32>
    %c0_3 = arith.constant 0 : index
    %c0_4 = arith.constant 0 : index
    %4 = vector.load %arg3[%c0_3, %c0_4] : memref<1x256xf32, #tpu.memory_space<vmem>>, vector<1x256xf32>
    %5 = vector.broadcast %4 : vector<1x256xf32> to vector<64x256xf32>
    %6 = arith.addf %3, %5 : vector<64x256xf32>
    %7 = math.tanh %6 : vector<64x256xf32>
    %c0_5 = arith.constant 0 : index
    %c0_6 = arith.constant 0 : index
    %8 = vector.load %arg4[%c0_5, %c0_6] : memref<1x256xf32, #tpu.memory_space<vmem>>, vector<1x256xf32>
    %9 = vector.broadcast %8 : vector<1x256xf32> to vector<64x256xf32>
    %10 = arith.mulf %7, %9 : vector<64x256xf32>
    %cst_7 = arith.constant dense<0.000000e+00> : vector<64xf32>
    %11 = vector.multi_reduction <add>, %10, %cst_7 [1] : vector<64x256xf32> to vector<64xf32>
    %12 = vector.shape_cast %11 : vector<64xf32> to vector<64x1xf32>
    %c0_8 = arith.constant 0 : index
    %c0_9 = arith.constant 0 : index
    %13 = vector.load %arg5[%c0_8, %c0_9] : memref<64x1xf32, #tpu.memory_space<vmem>>, vector<64x1xf32>
    tpu.vector_store %arg5[%c0_8, %c0_9], %12 {strides = array<i32>} : memref<64x1xf32, #tpu.memory_space<vmem>>, vector<64x1xf32>,
    return
  }
  func.func @transform_0(%arg0: i32) -> (i32, i32) {
    %c0_i32 = arith.constant 0 : i32
    %c0_i32_0 = arith.constant 0 : i32
    return %arg0, %c0_i32 : i32, i32
  }
  func.func @transform_1(%arg0: i32) -> (i32, i32) {
    %c0_i32 = arith.constant 0 : i32
    %c0_i32_0 = arith.constant 0 : i32
    %c0_i32_1 = arith.constant 0 : i32
    return %c0_i32, %c0_i32_0 : i32, i32
  }
  func.func @transform_2(%arg0: i32) -> (i32, i32) {
    %c0_i32 = arith.constant 0 : i32
    %c0_i32_0 = arith.constant 0 : i32
    %c0_i32_1 = arith.constant 0 : i32
    return %c0_i32, %c0_i32_0 : i32, i32
  }
  func.func @transform_3(%arg0: i32) -> (i32, i32) {
    %c0_i32 = arith.constant 0 : i32
    %c0_i32_0 = arith.constant 0 : i32
    %c0_i32_1 = arith.constant 0 : i32
    return %c0_i32, %c0_i32_0 : i32, i32
  }
  func.func @transform_4(%arg0: i32) -> (i32, i32) {
    %c0_i32 = arith.constant 0 : i32
    %c0_i32_0 = arith.constant 0 : i32
    return %arg0, %c0_i32 : i32, i32
  }
}

</mosaic_0001>

<llo_original>
// kernel: tpu_custom_call.1
$region0: #{tpu_custom_call.1}
  #allocation0 [shape = 'u32[]', space=smem, size = 0x4, offset = 0x4, fixed_abs, tag = 'smem constant byte address 0x4 - core index']
  #allocation1 [shape = 'u32[144,128]{1,0:T(1,128)}', space=vmem, size = 0x12000, scoped, tag = 'internal scratch']
  %s0 = inlined_call_operand.hbm [shape: f32[100,1024], index: 0, kind: input, shape index: {}]
  %s1 = inlined_call_operand.hbm [shape: bf16[1024,256], index: 1, kind: input, shape index: {}]
  %s2 = inlined_call_operand.vmem [shape: f32[1,256], index: 2, kind: input, shape index: {}]
  %s3 = inlined_call_operand.vmem [shape: f32[1,256], index: 3, kind: input, shape index: {}]
  %s4 = inlined_call_operand.vmem [shape: f32[100,1], index: 4, kind: output, shape index: {}]
  %s5 = sld [smem:[#allocation0]]
  $region105: #{tpu_custom_call.1} parent=0
    _
  %s7 = ssub.s32 1, %s5
  %s8 = scalar_select 0, %s7, %s5
  $region1: #{tpu_custom_call.1} parent=0
    #allocation2 [shape = 'u8[524288]{0}', space=vmem, size = 0x80000, scoped, tag = 'input window, operand 0']
    #allocation3 [shape = 's32[2]{0}', space=sflag, size = 0x8, scoped, tag = 'scoped memory for tpu_custom_call.1']
    #allocation4 [shape = 'u8[524288]{0}', space=vmem, size = 0x80000, scoped, tag = 'input window, operand 1, single buffered']
    #allocation5 [shape = 's32[1]{0}', space=sflag, size = 0x4, scoped, tag = 'scoped memory for tpu_custom_call.1']
    #allocation6 [shape = 'u8[65536]{0}', space=vmem, size = 0x10000, scoped, tag = 'output window, operand 0']
    %9 = vsyncpa [#allocation3], 0
    %s10 = scalar_lea.sflag [#allocation3], 1
    %11 = vsyncpa %s10, 0
    %12 = vsyncpa [#allocation5], 0
    loop: start=0, step=1, limit=4
    $region2: #{tpu_custom_call.1} parent=1 // loop_pre_header
      _
    $region3: #{tpu_custom_call.1} parent=1 // loop_header
      %s14 = sphi 0, %s18
      %p15 = scmp.ge.s32.totalorder %s14, 4
      %s24 = sphi 0, %s26
      %s27 = sphi 0, %s24
      %s28 = sphi 0, %s27
      %s44 = sphi 0, %s28
      %s48 = sphi 0, %s48
      %s50 = sphi 0, %s48
      %s51 = sphi 0, %s50
      %s65 = sphi 0, %s51
      %s69 = sphi 0, %s69
      %s71 = sphi 0, %s69
      %s72 = sphi 0, %s71
      %s86 = sphi 0, %s72
      %s90 = sphi 0, %s90
      %s92 = sphi 0, %s90
      %s93 = sphi 0, %s92
      %s107 = sphi 0, %s93
      %s113 = sphi 0, %s115
      %s116 = sphi 0, %s113
      %s117 = sphi 0, %s116
      %s133 = sphi 0, %s117
    $region4: #{tpu_custom_call.1} parent=1 // loop_header_branch
      %17 = sbr.rel (%p15) target = $region8
    $region5: #{tpu_custom_call.1} parent=1 // loop_body
      %s19 = ssub.s32 %s14, 1
      %s20 = ssub.s32 %s14, 2
      %s21 = sadd.s32 %s14, 1
      %s22 = ssub.s32 %s14, %s21
      %p23 = scmp.eq.s32.totalorder %s22, 0
      %s25 = sadd.s32 %s24, 1
      %s26 = scalar_select %p23, %s24, %s25
      %p29 = pneg %p23
      %p30 = scmp.eq.s32.totalorder %s14, 1
      %p31 = por %p29, %p30
      %p32 = scmp.ne.s32.totalorder %s24, %s27
      %p33 = scmp.eq.s32.totalorder %s14, 0
      %p34 = por %p32, %p33
      %p35 = scmp.ne.s32.totalorder %s24, %s27
      %p36 = scmp.eq.s32.totalorder %s19, 1
      %p37 = por %p35, %p36
      %p38 = scmp.ne.s32.totalorder %s27, %s28
      %p39 = scmp.eq.s32.totalorder %s19, 0
      %p40 = por %p38, %p39
      %p41 = scmp.ne.s32.totalorder %s27, %s28
      %p42 = scmp.eq.s32.totalorder %s20, 1
      %p43 = por %p41, %p42
      %p45 = scmp.ne.s32.totalorder %s28, %s44
      %p46 = scmp.eq.s32.totalorder %s20, 0
      %p47 = por %p45, %p46
      %s49 = sadd.s32 %s48, 1
      %p52 = scmp.eq.s32.totalorder %s14, 1
      %p53 = scmp.ne.s32.totalorder %s48, %s50
      %p54 = scmp.eq.s32.totalorder %s14, 0
      %p55 = por %p53, %p54
      %p56 = scmp.ne.s32.totalorder %s48, %s50
      %p57 = scmp.eq.s32.totalorder %s19, 1
      %p58 = por %p56, %p57
      %p59 = scmp.ne.s32.totalorder %s50, %s51
      %p60 = scmp.eq.s32.totalorder %s19, 0
      %p61 = por %p59, %p60
      %p62 = scmp.ne.s32.totalorder %s50, %s51
      %p63 = scmp.eq.s32.totalorder %s20, 1
      %p64 = por %p62, %p63
      %p66 = scmp.ne.s32.totalorder %s51, %s65
      %p67 = scmp.eq.s32.totalorder %s20, 0
      %p68 = por %p66, %p67
      %s70 = sadd.s32 %s69, 1
      %p73 = scmp.eq.s32.totalorder %s14, 1
      %p74 = scmp.ne.s32.totalorder %s69, %s71
      %p75 = scmp.eq.s32.totalorder %s14, 0
      %p76 = por %p74, %p75
      %p77 = scmp.ne.s32.totalorder %s69, %s71
      %p78 = scmp.eq.s32.totalorder %s19, 1
      %p79 = por %p77, %p78
      %p80 = scmp.ne.s32.totalorder %s71, %s72
      %p81 = scmp.eq.s32.totalorder %s19, 0
      %p82 = por %p80, %p81
      %p83 = scmp.ne.s32.totalorder %s71, %s72
      %p84 = scmp.eq.s32.totalorder %s20, 1
      %p85 = por %p83, %p84
      %p87 = scmp.ne.s32.totalorder %s72, %s86
      %p88 = scmp.eq.s32.totalorder %s20, 0
      %p89 = por %p87, %p88
      %s91 = sadd.s32 %s90, 1
      %p94 = scmp.eq.s32.totalorder %s14, 1
      %p95 = scmp.ne.s32.totalorder %s90, %s92
      %p96 = scmp.eq.s32.totalorder %s14, 0
      %p97 = por %p95, %p96
      %p98 = scmp.ne.s32.totalorder %s90, %s92
      %p99 = scmp.eq.s32.totalorder %s19, 1
      %p100 = por %p98, %p99
      %p101 = scmp.ne.s32.totalorder %s92, %s93
      %p102 = scmp.eq.s32.totalorder %s19, 0
      %p103 = por %p101, %p102
      %p104 = scmp.ne.s32.totalorder %s92, %s93
      %p105 = scmp.eq.s32.totalorder %s20, 1
      %p106 = por %p104, %p105
      %p108 = scmp.ne.s32.totalorder %s93, %s107
      %p109 = scmp.eq.s32.totalorder %s20, 0
      %p110 = por %p108, %p109
      %s111 = ssub.s32 %s14, %s21
      %p112 = scmp.eq.s32.totalorder %s111, 0
      %s114 = sadd.s32 %s113, 1
      %s115 = scalar_select %p112, %s113, %s114
      %p118 = pneg %p112
      %p119 = scmp.eq.s32.totalorder %s14, 1
      %p120 = por %p118, %p119
      %p121 = scmp.ne.s32.totalorder %s113, %s116
      %p122 = scmp.eq.s32.totalorder %s14, 0
      %p123 = por %p121, %p122
      %p124 = scmp.ne.s32.totalorder %s113, %s116
      %p125 = scmp.eq.s32.totalorder %s19, 1
      %p126 = por %p124, %p125
      %p127 = scmp.ne.s32.totalorder %s116, %s117
      %p128 = scmp.eq.s32.totalorder %s19, 0
      %p129 = por %p127, %p128
      %p130 = scmp.ne.s32.totalorder %s116, %s117
      %p131 = scmp.eq.s32.totalorder %s20, 1
      %p132 = por %p130, %p131
      %p134 = scmp.ne.s32.totalorder %s117, %s133
      %p135 = scmp.eq.s32.totalorder %s20, 0
      %p136 = por %p134, %p135
      %p137 = scmp.le.s32.totalorder 1, %s14
      %p138 = scmp.lt.s32.totalorder %s14, 3
      %p139 = pnand %p137, %p138
      %p140 = pneg %p139
      // Predicated region
      $region9: #{tpu_custom_call.1} parent=5 // pred_check
        _
      $region10: #{tpu_custom_call.1} parent=5 // pred_check_branch
        %142 = sbr.rel (%p139) target = $region12
      $region11: #{tpu_custom_call.1} parent=5 // pred_region
        %s143 = ssub.s32 %s14, 1
        // Predicated region
        $region13: #{tpu_custom_call.1} parent=11 // pred_check
          %p144 = pneg %p61
        $region14: #{tpu_custom_call.1} parent=11 // pred_check_branch
          %146 = sbr.rel (%p144) target = $region16
        $region15: #{tpu_custom_call.1} parent=11 // pred_region
          %s148 = ssub.s32 16384, 16384
          %149 = vsyncadd [#allocation5], %s148
          %s150 = sshll.u32 [#allocation4], 4
          %s151 = int_to_ptr.vmem [resolvable:$true] %s150
          %156 = dma.hbm_to_vmem [thread:$0]  %s1, 16384, %s151, [#allocation5], 128, 128, 8
        $region16: #{tpu_custom_call.1} parent=11 // pred_fallthru
          _
        // Predicated region
        $region17: #{tpu_custom_call.1} parent=11 // pred_check
          %p157 = pneg %p82
        $region18: #{tpu_custom_call.1} parent=11 // pred_check_branch
          %159 = sbr.rel (%p157) target = $region20
        $region19: #{tpu_custom_call.1} parent=11 // pred_region
          _
        $region20: #{tpu_custom_call.1} parent=11 // pred_fallthru
          _
        // Predicated region
        $region21: #{tpu_custom_call.1} parent=11 // pred_check
          %p160 = pneg %p103
        $region22: #{tpu_custom_call.1} parent=11 // pred_check_branch
          %162 = sbr.rel (%p160) target = $region24
        $region23: #{tpu_custom_call.1} parent=11 // pred_region
          _
        $region24: #{tpu_custom_call.1} parent=11 // pred_fallthru
          _
      $region12: #{tpu_custom_call.1} parent=5 // pred_fallthru
        _
      %p163 = scmp.lt.s32.totalorder %s14, 2
      // Predicated region
      $region25: #{tpu_custom_call.1} parent=5 // pred_check
        %p164 = pneg %p163
      $region26: #{tpu_custom_call.1} parent=5 // pred_check_branch
        %166 = sbr.rel (%p164) target = $region28
      $region27: #{tpu_custom_call.1} parent=5 // pred_region
        // Predicated region
        $region29: #{tpu_custom_call.1} parent=27 // pred_check
          %p167 = pneg %p34
        $region30: #{tpu_custom_call.1} parent=27 // pred_check_branch
          %169 = sbr.rel (%p167) target = $region32
        $region31: #{tpu_custom_call.1} parent=27 // pred_region
          %s170 = sand.u32 %s24, 1
          %s171 = scalar_lea.sflag [#allocation3], %s170
          %s172 = sand.u32 %s24, 1
          %s173 = smul.addr %s172, 512
          %s174 = scalar_lea.vmem [#allocation2], %s173
          %s175 = smul.u32 8, %s14
          %s176 = ssub.s32 13, %s175
          %p177 = scmp.lt.s32.totalorder %s176, 8
          %s178 = scalar_select %p177, %s176, 8
          %s179 = smul.u32 128, %s178
          %s180 = smul.u32 %s179, 8
          %s182 = ssub.s32 8192, %s180
          %183 = vsyncadd %s171, %s182
          %p184 = scmp.ne.s32.totalorder 0, %s180
          %s185 = smul.addr %s175, 8
          %s186 = smul.addr %s185, 128
          %s187 = scalar_lea.hbm %s0, %s186
          %s188 = smul.u32 64, %s178
          %s189 = sshll.u32 %s174, 4
          %s190 = int_to_ptr.vmem [resolvable:$true] %s189
          %s191 = sshll.u32 %s188, 4
          %195 = dma.hbm_to_vmem [thread:$0]  (%p184), %s187, %s191, %s190, %s171, 1024, 1024, 64
        $region32: #{tpu_custom_call.1} parent=27 // pred_fallthru
          _
      $region28: #{tpu_custom_call.1} parent=5 // pred_fallthru
        _
      %p196 = scmp.le.s32.totalorder 1, %s14
      %p197 = scmp.lt.s32.totalorder %s14, 3
      %p198 = pnand %p196, %p197
      %p199 = pneg %p198
      // Predicated region
      $region33: #{tpu_custom_call.1} parent=5 // pred_check
        _
      $region34: #{tpu_custom_call.1} parent=5 // pred_check_branch
        %201 = sbr.rel (%p198) target = $region36
      $region35: #{tpu_custom_call.1} parent=5 // pred_region
        %s202 = ssub.s32 %s14, 1
        %s203 = sand.u32 %s27, 1
        %s204 = scalar_lea.sflag [#allocation3], %s203
        %s205 = sand.u32 %s27, 1
        %s206 = smul.addr %s205, 512
        %s207 = scalar_lea.vmem [#allocation2], %s206
        // Predicated region
        $region37: #{tpu_custom_call.1} parent=35 // pred_check
          %p208 = pneg %p40
        $region38: #{tpu_custom_call.1} parent=35 // pred_check_branch
          %210 = sbr.rel (%p208) target = $region40
        $region39: #{tpu_custom_call.1} parent=35 // pred_region
          %211 = dma.done %s204, 8192
        $region40: #{tpu_custom_call.1} parent=35 // pred_fallthru
          _
        // Predicated region
        $region41: #{tpu_custom_call.1} parent=35 // pred_check
          %p212 = pneg %p61
        $region42: #{tpu_custom_call.1} parent=35 // pred_check_branch
          %214 = sbr.rel (%p212) target = $region44
        $region43: #{tpu_custom_call.1} parent=35 // pred_region
          %215 = dma.done [#allocation5], 16384
        $region44: #{tpu_custom_call.1} parent=35 // pred_fallthru
          _
        %s216 = sand.u32 %s27, 1
        %s217 = scalar_lea.sflag [#allocation3], %s216
        %s218 = sand.u32 %s27, 1
        %s219 = smul.addr %s218, 512
        %s220 = scalar_lea.vmem [#allocation2], %s219
        %p221 = pneg %p40
        %p222 = pneg %p37
        %p223 = pneg %p61
        %p224 = pneg %p58
        %p225 = pneg %p82
        %p226 = pneg %p79
        %p227 = pneg %p103
        %p228 = pneg %p100
        %p229 = pneg %p129
        %p230 = pneg %p126
        %s231 = sand.u32 %s116, 1
        %s232 = sand.u32 %s116, 1
        %s233 = smul.addr %s232, 64
        %s234 = scalar_lea.vmem [#allocation6], %s233
        %s235 = smul.u32 8, %s19
        %s236 = ssub.s32 13, %s235
        %p237 = scmp.lt.s32.totalorder %s236, 8
        %s238 = scalar_select %p237, %s236, 8
        %s239 = smul.u32 128, %s238
        %s240 = smul.u32 %s239, 8
        %s241 = smul.u32 8, %s19
        %s242 = ssub.s32 13, %s241
        %p243 = scmp.lt.s32.totalorder %s242, 8
        %s244 = scalar_select %p243, %s242, 8
        %s245 = smul.u32 128, %s244
        %v246 = vld [vmem:[%s207] sm:$0xff]
        %v247 = vld [vmem:[%s207 + $0x8] sm:$0xff]
        %v248 = vld [vmem:[%s207 + $0x10] sm:$0xff]
        %v249 = vld [vmem:[%s207 + $0x18] sm:$0xff]
        %v250 = vld [vmem:[%s207 + $0x20] sm:$0xff]
        %v251 = vld [vmem:[%s207 + $0x28] sm:$0xff]
        %v252 = vld [vmem:[%s207 + $0x30] sm:$0xff]
        %v253 = vld [vmem:[%s207 + $0x38] sm:$0xff]
        %v254 = vld [vmem:[%s207 + $0x40] sm:$0xff]
        %v255 = vld [vmem:[%s207 + $0x48] sm:$0xff]
        %v256 = vld [vmem:[%s207 + $0x50] sm:$0xff]
        %v257 = vld [vmem:[%s207 + $0x58] sm:$0xff]
        %v258 = vld [vmem:[%s207 + $0x60] sm:$0xff]
        %v259 = vld [vmem:[%s207 + $0x68] sm:$0xff]
        %v260 = vld [vmem:[%s207 + $0x70] sm:$0xff]
        %v261 = vld [vmem:[%s207 + $0x78] sm:$0xff]
        %v262 = vld [vmem:[%s207 + $0x80] sm:$0xff]
        %v263 = vld [vmem:[%s207 + $0x88] sm:$0xff]
        %v264 = vld [vmem:[%s207 + $0x90] sm:$0xff]
        %v265 = vld [vmem:[%s207 + $0x98] sm:$0xff]
        %v266 = vld [vmem:[%s207 + $0xa0] sm:$0xff]
        %v267 = vld [vmem:[%s207 + $0xa8] sm:$0xff]
        %v268 = vld [vmem:[%s207 + $0xb0] sm:$0xff]
        %v269 = vld [vmem:[%s207 + $0xb8] sm:$0xff]
        %v270 = vld [vmem:[%s207 + $0xc0] sm:$0xff]
        %v271 = vld [vmem:[%s207 + $0xc8] sm:$0xff]
        %v272 = vld [vmem:[%s207 + $0xd0] sm:$0xff]
        %v273 = vld [vmem:[%s207 + $0xd8] sm:$0xff]
        %v274 = vld [vmem:[%s207 + $0xe0] sm:$0xff]
        %v275 = vld [vmem:[%s207 + $0xe8] sm:$0xff]
        %v276 = vld [vmem:[%s207 + $0xf0] sm:$0xff]
        %v277 = vld [vmem:[%s207 + $0xf8] sm:$0xff]
        %v278 = vld [vmem:[%s207 + $0x100] sm:$0xff]
        %v279 = vld [vmem:[%s207 + $0x108] sm:$0xff]
        %v280 = vld [vmem:[%s207 + $0x110] sm:$0xff]
        %v281 = vld [vmem:[%s207 + $0x118] sm:$0xff]
        %v282 = vld [vmem:[%s207 + $0x120] sm:$0xff]
        %v283 = vld [vmem:[%s207 + $0x128] sm:$0xff]
        %v284 = vld [vmem:[%s207 + $0x130] sm:$0xff]
        %v285 = vld [vmem:[%s207 + $0x138] sm:$0xff]
        %v286 = vld [vmem:[%s207 + $0x140] sm:$0xff]
        %v287 = vld [vmem:[%s207 + $0x148] sm:$0xff]
        %v288 = vld [vmem:[%s207 + $0x150] sm:$0xff]
        %v289 = vld [vmem:[%s207 + $0x158] sm:$0xff]
        %v290 = vld [vmem:[%s207 + $0x160] sm:$0xff]
        %v291 = vld [vmem:[%s207 + $0x168] sm:$0xff]
        %v292 = vld [vmem:[%s207 + $0x170] sm:$0xff]
        %v293 = vld [vmem:[%s207 + $0x178] sm:$0xff]
        %v294 = vld [vmem:[%s207 + $0x180] sm:$0xff]
        %v295 = vld [vmem:[%s207 + $0x188] sm:$0xff]
        %v296 = vld [vmem:[%s207 + $0x190] sm:$0xff]
        %v297 = vld [vmem:[%s207 + $0x198] sm:$0xff]
        %v298 = vld [vmem:[%s207 + $0x1a0] sm:$0xff]
        %v299 = vld [vmem:[%s207 + $0x1a8] sm:$0xff]
        %v300 = vld [vmem:[%s207 + $0x1b0] sm:$0xff]
        %v301 = vld [vmem:[%s207 + $0x1b8] sm:$0xff]
        %v302 = vld [vmem:[%s207 + $0x1c0] sm:$0xff]
        %v303 = vld [vmem:[%s207 + $0x1c8] sm:$0xff]
        %v304 = vld [vmem:[%s207 + $0x1d0] sm:$0xff]
        %v305 = vld [vmem:[%s207 + $0x1d8] sm:$0xff]
        %v306 = vld [vmem:[%s207 + $0x1e0] sm:$0xff]
        %v307 = vld [vmem:[%s207 + $0x1e8] sm:$0xff]
        %v308 = vld [vmem:[%s207 + $0x1f0] sm:$0xff]
        %v309 = vld [vmem:[%s207 + $0x1f8] sm:$0xff]
        %v310 = vpack.c.bf16 %v254, %v246
        %v311 = vpack.c.bf16 %v255, %v247
        %v312 = vpack.c.bf16 %v256, %v248
        %v313 = vpack.c.bf16 %v257, %v249
        %v314 = vpack.c.bf16 %v258, %v250
        %v315 = vpack.c.bf16 %v259, %v251
        %v316 = vpack.c.bf16 %v260, %v252
        %v317 = vpack.c.bf16 %v261, %v253
        %v318 = vpack.c.bf16 %v270, %v262
        %v319 = vpack.c.bf16 %v271, %v263
        %v320 = vpack.c.bf16 %v272, %v264
        %v321 = vpack.c.bf16 %v273, %v265
        %v322 = vpack.c.bf16 %v274, %v266
        %v323 = vpack.c.bf16 %v275, %v267
        %v324 = vpack.c.bf16 %v276, %v268
        %v325 = vpack.c.bf16 %v277, %v269
        %v326 = vpack.c.bf16 %v286, %v278
        %v327 = vpack.c.bf16 %v287, %v279
        %v328 = vpack.c.bf16 %v288, %v280
        %v329 = vpack.c.bf16 %v289, %v281
        %v330 = vpack.c.bf16 %v290, %v282
        %v331 = vpack.c.bf16 %v291, %v283
        %v332 = vpack.c.bf16 %v292, %v284
        %v333 = vpack.c.bf16 %v293, %v285
        %v334 = vpack.c.bf16 %v302, %v294
        %v335 = vpack.c.bf16 %v303, %v295
        %v336 = vpack.c.bf16 %v304, %v296
        %v337 = vpack.c.bf16 %v305, %v297
        %v338 = vpack.c.bf16 %v306, %v298
        %v339 = vpack.c.bf16 %v307, %v299
        %v340 = vpack.c.bf16 %v308, %v300
        %v341 = vpack.c.bf16 %v309, %v301
        %v342 = vld [vmem:[#allocation4] sm:$0xff]
        %v343 = vld [vmem:[#allocation4 + $0x8] sm:$0xff]
        %v344 = vld [vmem:[#allocation4 + $0x10] sm:$0xff]
        %v345 = vld [vmem:[#allocation4 + $0x18] sm:$0xff]
        %v346 = vld [vmem:[#allocation4 + $0x20] sm:$0xff]
        %v347 = vld [vmem:[#allocation4 + $0x28] sm:$0xff]
        %v348 = vld [vmem:[#allocation4 + $0x30] sm:$0xff]
        %v349 = vld [vmem:[#allocation4 + $0x38] sm:$0xff]
        %v350 = vld [vmem:[#allocation4 + $0x40] sm:$0xff]
        %v351 = vld [vmem:[#allocation4 + $0x48] sm:$0xff]
        %v352 = vld [vmem:[#allocation4 + $0x50] sm:$0xff]
        %v353 = vld [vmem:[#allocation4 + $0x58] sm:$0xff]
        %v354 = vld [vmem:[#allocation4 + $0x60] sm:$0xff]
        %v355 = vld [vmem:[#allocation4 + $0x68] sm:$0xff]
        %v356 = vld [vmem:[#allocation4 + $0x70] sm:$0xff]
        %v357 = vld [vmem:[#allocation4 + $0x78] sm:$0xff]
        %v358 = vld [vmem:[#allocation4 + $0x80] sm:$0xff]
        %v359 = vld [vmem:[#allocation4 + $0x88] sm:$0xff]
        %v360 = vld [vmem:[#allocation4 + $0x90] sm:$0xff]
        %v361 = vld [vmem:[#allocation4 + $0x98] sm:$0xff]
        %v362 = vld [vmem:[#allocation4 + $0xa0] sm:$0xff]
        %v363 = vld [vmem:[#allocation4 + $0xa8] sm:$0xff]
        %v364 = vld [vmem:[#allocation4 + $0xb0] sm:$0xff]
        %v365 = vld [vmem:[#allocation4 + $0xb8] sm:$0xff]
        %v366 = vld [vmem:[#allocation4 + $0xc0] sm:$0xff]
        %v367 = vld [vmem:[#allocation4 + $0xc8] sm:$0xff]
        %v368 = vld [vmem:[#allocation4 + $0xd0] sm:$0xff]
        %v369 = vld [vmem:[#allocation4 + $0xd8] sm:$0xff]
        %v370 = vld [vmem:[#allocation4 + $0xe0] sm:$0xff]
        %v371 = vld [vmem:[#allocation4 + $0xe8] sm:$0xff]
        %v372 = vld [vmem:[#allocation4 + $0xf0] sm:$0xff]
        %v373 = vld [vmem:[#allocation4 + $0xf8] sm:$0xff]
        %v374 = vld [vmem:[#allocation4 + $0x100] sm:$0xff]
        %v375 = vld [vmem:[#allocation4 + $0x108] sm:$0xff]
        %v376 = vld [vmem:[#allocation4 + $0x110] sm:$0xff]
        %v377 = vld [vmem:[#allocation4 + $0x118] sm:$0xff]
        %v378 = vld [vmem:[#allocation4 + $0x120] sm:$0xff]
        %v379 = vld [vmem:[#allocation4 + $0x128] sm:$0xff]
        %v380 = vld [vmem:[#allocation4 + $0x130] sm:$0xff]
        %v381 = vld [vmem:[#allocation4 + $0x138] sm:$0xff]
        %v382 = vld [vmem:[#allocation4 + $0x140] sm:$0xff]
        %v383 = vld [vmem:[#allocation4 + $0x148] sm:$0xff]
        %v384 = vld [vmem:[#allocation4 + $0x150] sm:$0xff]
        %v385 = vld [vmem:[#allocation4 + $0x158] sm:$0xff]
        %v386 = vld [vmem:[#allocation4 + $0x160] sm:$0xff]
        %v387 = vld [vmem:[#allocation4 + $0x168] sm:$0xff]
        %v388 = vld [vmem:[#allocation4 + $0x170] sm:$0xff]
        %v389 = vld [vmem:[#allocation4 + $0x178] sm:$0xff]
        %v390 = vld [vmem:[#allocation4 + $0x180] sm:$0xff]
        %v391 = vld [vmem:[#allocation4 + $0x188] sm:$0xff]
        %v392 = vld [vmem:[#allocation4 + $0x190] sm:$0xff]
        %v393 = vld [vmem:[#allocation4 + $0x198] sm:$0xff]
        %v394 = vld [vmem:[#allocation4 + $0x1a0] sm:$0xff]
        %v395 = vld [vmem:[#allocation4 + $0x1a8] sm:$0xff]
        %v396 = vld [vmem:[#allocation4 + $0x1b0] sm:$0xff]
        %v397 = vld [vmem:[#allocation4 + $0x1b8] sm:$0xff]
        %v398 = vld [vmem:[#allocation4 + $0x1c0] sm:$0xff]
        %v399 = vld [vmem:[#allocation4 + $0x1c8] sm:$0xff]
        %v400 = vld [vmem:[#allocation4 + $0x1d0] sm:$0xff]
        %v401 = vld [vmem:[#allocation4 + $0x1d8] sm:$0xff]
        %v402 = vld [vmem:[#allocation4 + $0x1e0] sm:$0xff]
        %v403 = vld [vmem:[#allocation4 + $0x1e8] sm:$0xff]
        %v404 = vld [vmem:[#allocation4 + $0x1f0] sm:$0xff]
        %v405 = vld [vmem:[#allocation4 + $0x1f8] sm:$0xff]
        %v406 = vld [vmem:[#allocation4 + $0x200] sm:$0xff]
        %v407 = vld [vmem:[#allocation4 + $0x208] sm:$0xff]
        %v408 = vld [vmem:[#allocation4 + $0x210] sm:$0xff]
        %v409 = vld [vmem:[#allocation4 + $0x218] sm:$0xff]
        %v410 = vld [vmem:[#allocation4 + $0x220] sm:$0xff]
        %v411 = vld [vmem:[#allocation4 + $0x228] sm:$0xff]
        %v412 = vld [vmem:[#allocation4 + $0x230] sm:$0xff]
        %v413 = vld [vmem:[#allocation4 + $0x238] sm:$0xff]
        %v414 = vld [vmem:[#allocation4 + $0x240] sm:$0xff]
        %v415 = vld [vmem:[#allocation4 + $0x248] sm:$0xff]
        %v416 = vld [vmem:[#allocation4 + $0x250] sm:$0xff]
        %v417 = vld [vmem:[#allocation4 + $0x258] sm:$0xff]
        %v418 = vld [vmem:[#allocation4 + $0x260] sm:$0xff]
        %v419 = vld [vmem:[#allocation4 + $0x268] sm:$0xff]
        %v420 = vld [vmem:[#allocation4 + $0x270] sm:$0xff]
        %v421 = vld [vmem:[#allocation4 + $0x278] sm:$0xff]
        %v422 = vld [vmem:[#allocation4 + $0x280] sm:$0xff]
        %v423 = vld [vmem:[#allocation4 + $0x288] sm:$0xff]
        %v424 = vld [vmem:[#allocation4 + $0x290] sm:$0xff]
        %v425 = vld [vmem:[#allocation4 + $0x298] sm:$0xff]
        %v426 = vld [vmem:[#allocation4 + $0x2a0] sm:$0xff]
        %v427 = vld [vmem:[#allocation4 + $0x2a8] sm:$0xff]
        %v428 = vld [vmem:[#allocation4 + $0x2b0] sm:$0xff]
        %v429 = vld [vmem:[#allocation4 + $0x2b8] sm:$0xff]
        %v430 = vld [vmem:[#allocation4 + $0x2c0] sm:$0xff]
        %v431 = vld [vmem:[#allocation4 + $0x2c8] sm:$0xff]
        %v432 = vld [vmem:[#allocation4 + $0x2d0] sm:$0xff]
        %v433 = vld [vmem:[#allocation4 + $0x2d8] sm:$0xff]
        %v434 = vld [vmem:[#allocation4 + $0x2e0] sm:$0xff]
        %v435 = vld [vmem:[#allocation4 + $0x2e8] sm:$0xff]
        %v436 = vld [vmem:[#allocation4 + $0x2f0] sm:$0xff]
        %v437 = vld [vmem:[#allocation4 + $0x2f8] sm:$0xff]
        %v438 = vld [vmem:[#allocation4 + $0x300] sm:$0xff]
        %v439 = vld [vmem:[#allocation4 + $0x308] sm:$0xff]
        %v440 = vld [vmem:[#allocation4 + $0x310] sm:$0xff]
        %v441 = vld [vmem:[#allocation4 + $0x318] sm:$0xff]
        %v442 = vld [vmem:[#allocation4 + $0x320] sm:$0xff]
        %v443 = vld [vmem:[#allocation4 + $0x328] sm:$0xff]
        %v444 = vld [vmem:[#allocation4 + $0x330] sm:$0xff]
        %v445 = vld [vmem:[#allocation4 + $0x338] sm:$0xff]
        %v446 = vld [vmem:[#allocation4 + $0x340] sm:$0xff]
        %v447 = vld [vmem:[#allocation4 + $0x348] sm:$0xff]
        %v448 = vld [vmem:[#allocation4 + $0x350] sm:$0xff]
        %v449 = vld [vmem:[#allocation4 + $0x358] sm:$0xff]
        %v450 = vld [vmem:[#allocation4 + $0x360] sm:$0xff]
        %v451 = vld [vmem:[#allocation4 + $0x368] sm:$0xff]
        %v452 = vld [vmem:[#allocation4 + $0x370] sm:$0xff]
        %v453 = vld [vmem:[#allocation4 + $0x378] sm:$0xff]
        %v454 = vld [vmem:[#allocation4 + $0x380] sm:$0xff]
        %v455 = vld [vmem:[#allocation4 + $0x388] sm:$0xff]
        %v456 = vld [vmem:[#allocation4 + $0x390] sm:$0xff]
        %v457 = vld [vmem:[#allocation4 + $0x398] sm:$0xff]
        %v458 = vld [vmem:[#allocation4 + $0x3a0] sm:$0xff]
        %v459 = vld [vmem:[#allocation4 + $0x3a8] sm:$0xff]
        %v460 = vld [vmem:[#allocation4 + $0x3b0] sm:$0xff]
        %v461 = vld [vmem:[#allocation4 + $0x3b8] sm:$0xff]
        %v462 = vld [vmem:[#allocation4 + $0x3c0] sm:$0xff]
        %v463 = vld [vmem:[#allocation4 + $0x3c8] sm:$0xff]
        %v464 = vld [vmem:[#allocation4 + $0x3d0] sm:$0xff]
        %v465 = vld [vmem:[#allocation4 + $0x3d8] sm:$0xff]
        %v466 = vld [vmem:[#allocation4 + $0x3e0] sm:$0xff]
        %v467 = vld [vmem:[#allocation4 + $0x3e8] sm:$0xff]
        %v468 = vld [vmem:[#allocation4 + $0x3f0] sm:$0xff]
        %v469 = vld [vmem:[#allocation4 + $0x3f8] sm:$0xff]
        %v470 = vld [vmem:[%s2] sm:$0x3]
        %v472 = vlaneseq
        %v473 = vshrl.u32 %v472, 7
        %v474 = vsub.s32 0, %v473
        %v475 = vrot.slane %v470, %v474
        %v476 = vlaneseq
        %v477 = vshrl.u32 %v476, 7
        %v478 = vsub.s32 1, %v477
        %v479 = vrot.slane %v470, %v478
        %v610 = vunpack.c.l.b16 %v342
        %v611 = vunpack.c.h.b16 %v342
        %v612 = vunpack.c.l.b16 %v343
        %v613 = vunpack.c.h.b16 %v343
        %v614 = vunpack.c.l.b16 %v344
        %v615 = vunpack.c.h.b16 %v344
        %v616 = vunpack.c.l.b16 %v345
        %v617 = vunpack.c.h.b16 %v345
        %v618 = vunpack.c.l.b16 %v346
        %v619 = vunpack.c.h.b16 %v346
        %v620 = vunpack.c.l.b16 %v347
        %v621 = vunpack.c.h.b16 %v347
        %v622 = vunpack.c.l.b16 %v348
        %v623 = vunpack.c.h.b16 %v348
        %v624 = vunpack.c.l.b16 %v349
        %v625 = vunpack.c.h.b16 %v349
        %v626 = vunpack.c.l.b16 %v350
        %v627 = vunpack.c.h.b16 %v350
        %v628 = vunpack.c.l.b16 %v351
        %v629 = vunpack.c.h.b16 %v351
        %v630 = vunpack.c.l.b16 %v352
        %v631 = vunpack.c.h.b16 %v352
        %v632 = vunpack.c.l.b16 %v353
        %v633 = vunpack.c.h.b16 %v353
        %v634 = vunpack.c.l.b16 %v354
        %v635 = vunpack.c.h.b16 %v354
        %v636 = vunpack.c.l.b16 %v355
        %v637 = vunpack.c.h.b16 %v355
        %v638 = vunpack.c.l.b16 %v356
        %v639 = vunpack.c.h.b16 %v356
        %v640 = vunpack.c.l.b16 %v357
        %v641 = vunpack.c.h.b16 %v357
        %v642 = vunpack.c.l.b16 %v358
        %v643 = vunpack.c.h.b16 %v358
        %v644 = vunpack.c.l.b16 %v359
        %v645 = vunpack.c.h.b16 %v359
        %v646 = vunpack.c.l.b16 %v360
        %v647 = vunpack.c.h.b16 %v360
        %v648 = vunpack.c.l.b16 %v361
        %v649 = vunpack.c.h.b16 %v361
        %v650 = vunpack.c.l.b16 %v362
        %v651 = vunpack.c.h.b16 %v362
        %v652 = vunpack.c.l.b16 %v363
        %v653 = vunpack.c.h.b16 %v363
        %v654 = vunpack.c.l.b16 %v364
        %v655 = vunpack.c.h.b16 %v364
        %v656 = vunpack.c.l.b16 %v365
        %v657 = vunpack.c.h.b16 %v365
        %v658 = vunpack.c.l.b16 %v366
        %v659 = vunpack.c.h.b16 %v366
        %v660 = vunpack.c.l.b16 %v367
        %v661 = vunpack.c.h.b16 %v367
        %v662 = vunpack.c.l.b16 %v368
        %v663 = vunpack.c.h.b16 %v368
        %v664 = vunpack.c.l.b16 %v369
        %v665 = vunpack.c.h.b16 %v369
        %v666 = vunpack.c.l.b16 %v370
        %v667 = vunpack.c.h.b16 %v370
        %v668 = vunpack.c.l.b16 %v371
        %v669 = vunpack.c.h.b16 %v371
        %v670 = vunpack.c.l.b16 %v372
        %v671 = vunpack.c.h.b16 %v372
        %v672 = vunpack.c.l.b16 %v373
        %v673 = vunpack.c.h.b16 %v373
        %v674 = vunpack.c.l.b16 %v374
        %v675 = vunpack.c.h.b16 %v374
        %v676 = vunpack.c.l.b16 %v375
        %v677 = vunpack.c.h.b16 %v375
        %v678 = vunpack.c.l.b16 %v376
        %v679 = vunpack.c.h.b16 %v376
        %v680 = vunpack.c.l.b16 %v377
        %v681 = vunpack.c.h.b16 %v377
        %v682 = vunpack.c.l.b16 %v378
        %v683 = vunpack.c.h.b16 %v378
        %v684 = vunpack.c.l.b16 %v379
        %v685 = vunpack.c.h.b16 %v379
        %v686 = vunpack.c.l.b16 %v380
        %v687 = vunpack.c.h.b16 %v380
        %v688 = vunpack.c.l.b16 %v381
        %v689 = vunpack.c.h.b16 %v381
        %v690 = vunpack.c.l.b16 %v382
        %v691 = vunpack.c.h.b16 %v382
        %v692 = vunpack.c.l.b16 %v383
        %v693 = vunpack.c.h.b16 %v383
        %v694 = vunpack.c.l.b16 %v384
        %v695 = vunpack.c.h.b16 %v384
        %v696 = vunpack.c.l.b16 %v385
        %v697 = vunpack.c.h.b16 %v385
        %v698 = vunpack.c.l.b16 %v386
        %v699 = vunpack.c.h.b16 %v386
        %v700 = vunpack.c.l.b16 %v387
        %v701 = vunpack.c.h.b16 %v387
        %v702 = vunpack.c.l.b16 %v388
        %v703 = vunpack.c.h.b16 %v388
        %v704 = vunpack.c.l.b16 %v389
        %v705 = vunpack.c.h.b16 %v389
        %v706 = vunpack.c.l.b16 %v390
        %v707 = vunpack.c.h.b16 %v390
        %v708 = vunpack.c.l.b16 %v391
        %v709 = vunpack.c.h.b16 %v391
        %v710 = vunpack.c.l.b16 %v392
        %v711 = vunpack.c.h.b16 %v392
        %v712 = vunpack.c.l.b16 %v393
        %v713 = vunpack.c.h.b16 %v393
        %v714 = vunpack.c.l.b16 %v394
        %v715 = vunpack.c.h.b16 %v394
        %v716 = vunpack.c.l.b16 %v395
        %v717 = vunpack.c.h.b16 %v395
        %v718 = vunpack.c.l.b16 %v396
        %v719 = vunpack.c.h.b16 %v396
        %v720 = vunpack.c.l.b16 %v397
        %v721 = vunpack.c.h.b16 %v397
        %v722 = vunpack.c.l.b16 %v398
        %v723 = vunpack.c.h.b16 %v398
        %v724 = vunpack.c.l.b16 %v399
        %v725 = vunpack.c.h.b16 %v399
        %v726 = vunpack.c.l.b16 %v400
        %v727 = vunpack.c.h.b16 %v400
        %v728 = vunpack.c.l.b16 %v401
        %v729 = vunpack.c.h.b16 %v401
        %v730 = vunpack.c.l.b16 %v402
        %v731 = vunpack.c.h.b16 %v402
        %v732 = vunpack.c.l.b16 %v403
        %v733 = vunpack.c.h.b16 %v403
        %v734 = vunpack.c.l.b16 %v404
        %v735 = vunpack.c.h.b16 %v404
        %v736 = vunpack.c.l.b16 %v405
        %v737 = vunpack.c.h.b16 %v405
        %v738 = vunpack.c.l.b16 %v406
        %v739 = vunpack.c.h.b16 %v406
        %v740 = vunpack.c.l.b16 %v407
        %v741 = vunpack.c.h.b16 %v407
        %v742 = vunpack.c.l.b16 %v408
        %v743 = vunpack.c.h.b16 %v408
        %v744 = vunpack.c.l.b16 %v409
        %v745 = vunpack.c.h.b16 %v409
        %v746 = vunpack.c.l.b16 %v410
        %v747 = vunpack.c.h.b16 %v410
        %v748 = vunpack.c.l.b16 %v411
        %v749 = vunpack.c.h.b16 %v411
        %v750 = vunpack.c.l.b16 %v412
        %v751 = vunpack.c.h.b16 %v412
        %v752 = vunpack.c.l.b16 %v413
        %v753 = vunpack.c.h.b16 %v413
        %v754 = vunpack.c.l.b16 %v414
        %v755 = vunpack.c.h.b16 %v414
        %v756 = vunpack.c.l.b16 %v415
        %v757 = vunpack.c.h.b16 %v415
        %v758 = vunpack.c.l.b16 %v416
        %v759 = vunpack.c.h.b16 %v416
        %v760 = vunpack.c.l.b16 %v417
        %v761 = vunpack.c.h.b16 %v417
        %v762 = vunpack.c.l.b16 %v418
        %v763 = vunpack.c.h.b16 %v418
        %v764 = vunpack.c.l.b16 %v419
        %v765 = vunpack.c.h.b16 %v419
        %v766 = vunpack.c.l.b16 %v420
        %v767 = vunpack.c.h.b16 %v420
        %v768 = vunpack.c.l.b16 %v421
        %v769 = vunpack.c.h.b16 %v421
        %v770 = vunpack.c.l.b16 %v422
        %v771 = vunpack.c.h.b16 %v422
        %v772 = vunpack.c.l.b16 %v423
        %v773 = vunpack.c.h.b16 %v423
        %v774 = vunpack.c.l.b16 %v424
        %v775 = vunpack.c.h.b16 %v424
        %v776 = vunpack.c.l.b16 %v425
        %v777 = vunpack.c.h.b16 %v425
        %v778 = vunpack.c.l.b16 %v426
        %v779 = vunpack.c.h.b16 %v426
        %v780 = vunpack.c.l.b16 %v427
        %v781 = vunpack.c.h.b16 %v427
        %v782 = vunpack.c.l.b16 %v428
        %v783 = vunpack.c.h.b16 %v428
        %v784 = vunpack.c.l.b16 %v429
        %v785 = vunpack.c.h.b16 %v429
        %v786 = vunpack.c.l.b16 %v430
        %v787 = vunpack.c.h.b16 %v430
        %v788 = vunpack.c.l.b16 %v431
        %v789 = vunpack.c.h.b16 %v431
        %v790 = vunpack.c.l.b16 %v432
        %v791 = vunpack.c.h.b16 %v432
        %v792 = vunpack.c.l.b16 %v433
        %v793 = vunpack.c.h.b16 %v433
        %v794 = vunpack.c.l.b16 %v434
        %v795 = vunpack.c.h.b16 %v434
        %v796 = vunpack.c.l.b16 %v435
        %v797 = vunpack.c.h.b16 %v435
        %v798 = vunpack.c.l.b16 %v436
        %v799 = vunpack.c.h.b16 %v436
        %v800 = vunpack.c.l.b16 %v437
        %v801 = vunpack.c.h.b16 %v437
        %v802 = vunpack.c.l.b16 %v438
        %v803 = vunpack.c.h.b16 %v438
        %v804 = vunpack.c.l.b16 %v439
        %v805 = vunpack.c.h.b16 %v439
        %v806 = vunpack.c.l.b16 %v440
        %v807 = vunpack.c.h.b16 %v440
        %v808 = vunpack.c.l.b16 %v441
        %v809 = vunpack.c.h.b16 %v441
        %v810 = vunpack.c.l.b16 %v442
        %v811 = vunpack.c.h.b16 %v442
        %v812 = vunpack.c.l.b16 %v443
        %v813 = vunpack.c.h.b16 %v443
        %v814 = vunpack.c.l.b16 %v444
        %v815 = vunpack.c.h.b16 %v444
        %v816 = vunpack.c.l.b16 %v445
        %v817 = vunpack.c.h.b16 %v445
        %v818 = vunpack.c.l.b16 %v446
        %v819 = vunpack.c.h.b16 %v446
        %v820 = vunpack.c.l.b16 %v447
        %v821 = vunpack.c.h.b16 %v447
        %v822 = vunpack.c.l.b16 %v448
        %v823 = vunpack.c.h.b16 %v448
        %v824 = vunpack.c.l.b16 %v449
        %v825 = vunpack.c.h.b16 %v449
        %v826 = vunpack.c.l.b16 %v450
        %v827 = vunpack.c.h.b16 %v450
        %v828 = vunpack.c.l.b16 %v451
        %v829 = vunpack.c.h.b16 %v451
        %v830 = vunpack.c.l.b16 %v452
        %v831 = vunpack.c.h.b16 %v452
        %v832 = vunpack.c.l.b16 %v453
        %v833 = vunpack.c.h.b16 %v453
        %v834 = vunpack.c.l.b16 %v454
        %v835 = vunpack.c.h.b16 %v454
        %v836 = vunpack.c.l.b16 %v455
        %v837 = vunpack.c.h.b16 %v455
        %v838 = vunpack.c.l.b16 %v456
        %v839 = vunpack.c.h.b16 %v456
        %v840 = vunpack.c.l.b16 %v457
        %v841 = vunpack.c.h.b16 %v457
        %v842 = vunpack.c.l.b16 %v458
        %v843 = vunpack.c.h.b16 %v458
        %v844 = vunpack.c.l.b16 %v459
        %v845 = vunpack.c.h.b16 %v459
        %v846 = vunpack.c.l.b16 %v460
        %v847 = vunpack.c.h.b16 %v460
        %v848 = vunpack.c.l.b16 %v461
        %v849 = vunpack.c.h.b16 %v461
        %v850 = vunpack.c.l.b16 %v462
        %v851 = vunpack.c.h.b16 %v462
        %v852 = vunpack.c.l.b16 %v463
        %v853 = vunpack.c.h.b16 %v463
        %v854 = vunpack.c.l.b16 %v464
        %v855 = vunpack.c.h.b16 %v464
        %v856 = vunpack.c.l.b16 %v465
        %v857 = vunpack.c.h.b16 %v465
        %v858 = vunpack.c.l.b16 %v466
        %v859 = vunpack.c.h.b16 %v466
        %v860 = vunpack.c.l.b16 %v467
        %v861 = vunpack.c.h.b16 %v467
        %v862 = vunpack.c.l.b16 %v468
        %v863 = vunpack.c.h.b16 %v468
        %v864 = vunpack.c.l.b16 %v469
        %v865 = vunpack.c.h.b16 %v469
        %v866 = vpack.c.b16 %v612, %v610
        %v867 = vpack.c.b16 %v613, %v611
        %v868 = vpack.c.b16 %v616, %v614
        %v869 = vpack.c.b16 %v617, %v615
        %v870 = vpack.c.b16 %v620, %v618
        %v871 = vpack.c.b16 %v621, %v619
        %v872 = vpack.c.b16 %v624, %v622
        %v873 = vpack.c.b16 %v625, %v623
        %v874 = vpack.c.b16 %v628, %v626
        %v875 = vpack.c.b16 %v629, %v627
        %v876 = vpack.c.b16 %v632, %v630
        %v877 = vpack.c.b16 %v633, %v631
        %v878 = vpack.c.b16 %v636, %v634
        %v879 = vpack.c.b16 %v637, %v635
        %v880 = vpack.c.b16 %v640, %v638
        %v881 = vpack.c.b16 %v641, %v639
        %v882 = vpack.c.b16 %v644, %v642
        %v883 = vpack.c.b16 %v645, %v643
        %v884 = vpack.c.b16 %v648, %v646
        %v885 = vpack.c.b16 %v649, %v647
        %v886 = vpack.c.b16 %v652, %v650
        %v887 = vpack.c.b16 %v653, %v651
        %v888 = vpack.c.b16 %v656, %v654
        %v889 = vpack.c.b16 %v657, %v655
        %v890 = vpack.c.b16 %v660, %v658
        %v891 = vpack.c.b16 %v661, %v659
        %v892 = vpack.c.b16 %v664, %v662
        %v893 = vpack.c.b16 %v665, %v663
        %v894 = vpack.c.b16 %v668, %v666
        %v895 = vpack.c.b16 %v669, %v667
        %v896 = vpack.c.b16 %v672, %v670
        %v897 = vpack.c.b16 %v673, %v671
        %v898 = vpack.c.b16 %v676, %v674
        %v899 = vpack.c.b16 %v677, %v675
        %v900 = vpack.c.b16 %v680, %v678
        %v901 = vpack.c.b16 %v681, %v679
        %v902 = vpack.c.b16 %v684, %v682
        %v903 = vpack.c.b16 %v685, %v683
        %v904 = vpack.c.b16 %v688, %v686
        %v905 = vpack.c.b16 %v689, %v687
        %v906 = vpack.c.b16 %v692, %v690
        %v907 = vpack.c.b16 %v693, %v691
        %v908 = vpack.c.b16 %v696, %v694
        %v909 = vpack.c.b16 %v697, %v695
        %v910 = vpack.c.b16 %v700, %v698
        %v911 = vpack.c.b16 %v701, %v699
        %v912 = vpack.c.b16 %v704, %v702
        %v913 = vpack.c.b16 %v705, %v703
        %v914 = vpack.c.b16 %v708, %v706
        %v915 = vpack.c.b16 %v709, %v707
        %v916 = vpack.c.b16 %v712, %v710
        %v917 = vpack.c.b16 %v713, %v711
        %v918 = vpack.c.b16 %v716, %v714
        %v919 = vpack.c.b16 %v717, %v715
        %v920 = vpack.c.b16 %v720, %v718
        %v921 = vpack.c.b16 %v721, %v719
        %v922 = vpack.c.b16 %v724, %v722
        %v923 = vpack.c.b16 %v725, %v723
        %v924 = vpack.c.b16 %v728, %v726
        %v925 = vpack.c.b16 %v729, %v727
        %v926 = vpack.c.b16 %v732, %v730
        %v927 = vpack.c.b16 %v733, %v731
        %v928 = vpack.c.b16 %v736, %v734
        %v929 = vpack.c.b16 %v737, %v735
        %v930 = vpack.c.b16 %v740, %v738
        %v931 = vpack.c.b16 %v741, %v739
        %v932 = vpack.c.b16 %v744, %v742
        %v933 = vpack.c.b16 %v745, %v743
        %v934 = vpack.c.b16 %v748, %v746
        %v935 = vpack.c.b16 %v749, %v747
        %v936 = vpack.c.b16 %v752, %v750
        %v937 = vpack.c.b16 %v753, %v751
        %v938 = vpack.c.b16 %v756, %v754
        %v939 = vpack.c.b16 %v757, %v755
        %v940 = vpack.c.b16 %v760, %v758
        %v941 = vpack.c.b16 %v761, %v759
        %v942 = vpack.c.b16 %v764, %v762
        %v943 = vpack.c.b16 %v765, %v763
        %v944 = vpack.c.b16 %v768, %v766
        %v945 = vpack.c.b16 %v769, %v767
        %v946 = vpack.c.b16 %v772, %v770
        %v947 = vpack.c.b16 %v773, %v771
        %v948 = vpack.c.b16 %v776, %v774
        %v949 = vpack.c.b16 %v777, %v775
        %v950 = vpack.c.b16 %v780, %v778
        %v951 = vpack.c.b16 %v781, %v779
        %v952 = vpack.c.b16 %v784, %v782
        %v953 = vpack.c.b16 %v785, %v783
        %v954 = vpack.c.b16 %v788, %v786
        %v955 = vpack.c.b16 %v789, %v787
        %v956 = vpack.c.b16 %v792, %v790
        %v957 = vpack.c.b16 %v793, %v791
        %v958 = vpack.c.b16 %v796, %v794
        %v959 = vpack.c.b16 %v797, %v795
        %v960 = vpack.c.b16 %v800, %v798
        %v961 = vpack.c.b16 %v801, %v799
        %v962 = vpack.c.b16 %v804, %v802
        %v963 = vpack.c.b16 %v805, %v803
        %v964 = vpack.c.b16 %v808, %v806
        %v965 = vpack.c.b16 %v809, %v807
        %v966 = vpack.c.b16 %v812, %v810
        %v967 = vpack.c.b16 %v813, %v811
        %v968 = vpack.c.b16 %v816, %v814
        %v969 = vpack.c.b16 %v817, %v815
        %v970 = vpack.c.b16 %v820, %v818
        %v971 = vpack.c.b16 %v821, %v819
        %v972 = vpack.c.b16 %v824, %v822
        %v973 = vpack.c.b16 %v825, %v823
        %v974 = vpack.c.b16 %v828, %v826
        %v975 = vpack.c.b16 %v829, %v827
        %v976 = vpack.c.b16 %v832, %v830
        %v977 = vpack.c.b16 %v833, %v831
        %v978 = vpack.c.b16 %v836, %v834
        %v979 = vpack.c.b16 %v837, %v835
        %v980 = vpack.c.b16 %v840, %v838
        %v981 = vpack.c.b16 %v841, %v839
        %v982 = vpack.c.b16 %v844, %v842
        %v983 = vpack.c.b16 %v845, %v843
        %v984 = vpack.c.b16 %v848, %v846
        %v985 = vpack.c.b16 %v849, %v847
        %v986 = vpack.c.b16 %v852, %v850
        %v987 = vpack.c.b16 %v853, %v851
        %v988 = vpack.c.b16 %v856, %v854
        %v989 = vpack.c.b16 %v857, %v855
        %v990 = vpack.c.b16 %v860, %v858
        %v991 = vpack.c.b16 %v861, %v859
        %v992 = vpack.c.b16 %v864, %v862
        %v993 = vpack.c.b16 %v865, %v863
        %1122 = vmatprep.subr.bf16.mxu0 %v867
        %1123 = vmatpush1.bf16.msra.mxu0 %v866
        %1124 = vmatprep.subr.bf16.mxu0 %v869
        %1125 = vmatpush1.bf16.msra.mxu0 %v868
        %1126 = vmatprep.subr.bf16.mxu0 %v871
        %1127 = vmatpush1.bf16.msra.mxu0 %v870
        %1128 = vmatprep.subr.bf16.mxu0 %v873
        %1129 = vmatpush1.bf16.msra.mxu0 %v872
        %1130 = vmatprep.subr.bf16.mxu0 %v875
        %1131 = vmatpush1.bf16.msra.mxu0 %v874
        %1132 = vmatprep.subr.bf16.mxu0 %v877
        %1133 = vmatpush1.bf16.msra.mxu0 %v876
        %1134 = vmatprep.subr.bf16.mxu0 %v879
        %1135 = vmatpush1.bf16.msra.mxu0 %v878
        %1136 = vmatprep.subr.bf16.mxu0 %v881
        %1137 = vmatpush1.bf16.msra.mxu0 %v880
        %1138 = vmatprep.subr.bf16.mxu0 %v883
        %1139 = vmatpush1.bf16.msra.mxu0 %v882
        %1140 = vmatprep.subr.bf16.mxu0 %v885
        %1141 = vmatpush1.bf16.msra.mxu0 %v884
        %1142 = vmatprep.subr.bf16.mxu0 %v887
        %1143 = vmatpush1.bf16.msra.mxu0 %v886
        %1144 = vmatprep.subr.bf16.mxu0 %v889
        %1145 = vmatpush1.bf16.msra.mxu0 %v888
        %1146 = vmatprep.subr.bf16.mxu0 %v891
        %1147 = vmatpush1.bf16.msra.mxu0 %v890
        %1148 = vmatprep.subr.bf16.mxu0 %v893
        %1149 = vmatpush1.bf16.msra.mxu0 %v892
        %1150 = vmatprep.subr.bf16.mxu0 %v895
        %1151 = vmatpush1.bf16.msra.mxu0 %v894
        %1152 = vmatprep.subr.bf16.mxu0 %v897
        %1153 = vmatpush1.bf16.msra.mxu0 %v896
        %1154 = vmatprep.mubr.bf16.mxu0 %v311
        %1155 = vmatmul.mubr.bf16.gmra.mrb[0].mxu0 %v310
        %v1156 = vpop.f32.mrb[0].mxu0
        %v1157 = vadd.f32 %v475, %v1156
        %v1158 = vpop.f32.mrb[0].mxu0
        %v1159 = vadd.f32 %v479, %v1158
        %v1160 = vpop.f32.mrb[0].mxu0
        %v1161 = vadd.f32 %v475, %v1160
        %v1162 = vpop.f32.mrb[0].mxu0
        %v1163 = vadd.f32 %v479, %v1162
        %1164 = vmatprep.mubr.bf16.mxu0 %v319
        %1165 = vmatmul.mubr.bf16.gmra.mrb[0].mxu0 %v318
        %v1166 = vpop.f32.mrb[0].mxu0
        %v1167 = vadd.f32 %v475, %v1166
        %v1168 = vpop.f32.mrb[0].mxu0
        %v1169 = vadd.f32 %v479, %v1168
        %v1170 = vpop.f32.mrb[0].mxu0
        %v1171 = vadd.f32 %v475, %v1170
        %v1172 = vpop.f32.mrb[0].mxu0
        %v1173 = vadd.f32 %v479, %v1172
        %1174 = vmatprep.mubr.bf16.mxu0 %v327
        %1175 = vmatmul.mubr.bf16.gmra.mrb[0].mxu0 %v326
        %v1176 = vpop.f32.mrb[0].mxu0
        %v1177 = vadd.f32 %v475, %v1176
        %v1178 = vpop.f32.mrb[0].mxu0
        %v1179 = vadd.f32 %v479, %v1178
        %v1180 = vpop.f32.mrb[0].mxu0
        %v1181 = vadd.f32 %v475, %v1180
        %v1182 = vpop.f32.mrb[0].mxu0
        %v1183 = vadd.f32 %v479, %v1182
        %1184 = vmatprep.mubr.bf16.mxu0 %v335
        %1185 = vmatmul.mubr.bf16.gmra.mrb[0].mxu0 %v334
        %v1186 = vpop.f32.mrb[0].mxu0
        %v1187 = vadd.f32 %v475, %v1186
        %v1188 = vpop.f32.mrb[0].mxu0
        %v1189 = vadd.f32 %v479, %v1188
        %v1190 = vpop.f32.mrb[0].mxu0
        %v1191 = vadd.f32 %v475, %v1190
        %v1192 = vpop.f32.mrb[0].mxu0
        %v1193 = vadd.f32 %v479, %v1192
        %1194 = vdwg.mxu0
        %1195 = vmatprep.subr.bf16.mxu0 %v899
        %1196 = vmatpush1.bf16.msra.mxu0 %v898
        %1197 = vmatprep.subr.bf16.mxu0 %v901
        %1198 = vmatpush1.bf16.msra.mxu0 %v900
        %1199 = vmatprep.subr.bf16.mxu0 %v903
        %1200 = vmatpush1.bf16.msra.mxu0 %v902
        %1201 = vmatprep.subr.bf16.mxu0 %v905
        %1202 = vmatpush1.bf16.msra.mxu0 %v904
        %1203 = vmatprep.subr.bf16.mxu0 %v907
        %1204 = vmatpush1.bf16.msra.mxu0 %v906
        %1205 = vmatprep.subr.bf16.mxu0 %v909
        %1206 = vmatpush1.bf16.msra.mxu0 %v908
        %1207 = vmatprep.subr.bf16.mxu0 %v911
        %1208 = vmatpush1.bf16.msra.mxu0 %v910
        %1209 = vmatprep.subr.bf16.mxu0 %v913
        %1210 = vmatpush1.bf16.msra.mxu0 %v912
        %1211 = vmatprep.subr.bf16.mxu0 %v915
        %1212 = vmatpush1.bf16.msra.mxu0 %v914
        %1213 = vmatprep.subr.bf16.mxu0 %v917
        %1214 = vmatpush1.bf16.msra.mxu0 %v916
        %1215 = vmatprep.subr.bf16.mxu0 %v919
        %1216 = vmatpush1.bf16.msra.mxu0 %v918
        %1217 = vmatprep.subr.bf16.mxu0 %v921
        %1218 = vmatpush1.bf16.msra.mxu0 %v920
        %1219 = vmatprep.subr.bf16.mxu0 %v923
        %1220 = vmatpush1.bf16.msra.mxu0 %v922
        %1221 = vmatprep.subr.bf16.mxu0 %v925
        %1222 = vmatpush1.bf16.msra.mxu0 %v924
        %1223 = vmatprep.subr.bf16.mxu0 %v927
        %1224 = vmatpush1.bf16.msra.mxu0 %v926
        %1225 = vmatprep.subr.bf16.mxu0 %v929
        %1226 = vmatpush1.bf16.msra.mxu0 %v928
        %1227 = vmatprep.mubr.bf16.mxu0 %v313
        %1228 = vmatmul.mubr.bf16.gmra.mrb[0].mxu0 %v312
        %v1229 = vpop.f32.mrb[0].mxu0
        %v1230 = vadd.f32 %v1157, %v1229
        %v1231 = vpop.f32.mrb[0].mxu0
        %v1232 = vadd.f32 %v1159, %v1231
        %v1233 = vpop.f32.mrb[0].mxu0
        %v1234 = vadd.f32 %v1161, %v1233
        %v1235 = vpop.f32.mrb[0].mxu0
        %v1236 = vadd.f32 %v1163, %v1235
        %1237 = vmatprep.mubr.bf16.mxu0 %v321
        %1238 = vmatmul.mubr.bf16.gmra.mrb[0].mxu0 %v320
        %v1239 = vpop.f32.mrb[0].mxu0
        %v1240 = vadd.f32 %v1167, %v1239
        %v1241 = vpop.f32.mrb[0].mxu0
        %v1242 = vadd.f32 %v1169, %v1241
        %v1243 = vpop.f32.mrb[0].mxu0
        %v1244 = vadd.f32 %v1171, %v1243
        %v1245 = vpop.f32.mrb[0].mxu0
        %v1246 = vadd.f32 %v1173, %v1245
        %1247 = vmatprep.mubr.bf16.mxu0 %v329
        %1248 = vmatmul.mubr.bf16.gmra.mrb[0].mxu0 %v328
        %v1249 = vpop.f32.mrb[0].mxu0
        %v1250 = vadd.f32 %v1177, %v1249
        %v1251 = vpop.f32.mrb[0].mxu0
        %v1252 = vadd.f32 %v1179, %v1251
        %v1253 = vpop.f32.mrb[0].mxu0
        %v1254 = vadd.f32 %v1181, %v1253
        %v1255 = vpop.f32.mrb[0].mxu0
        %v1256 = vadd.f32 %v1183, %v1255
        %1257 = vmatprep.mubr.bf16.mxu0 %v337
        %1258 = vmatmul.mubr.bf16.gmra.mrb[0].mxu0 %v336
        %v1259 = vpop.f32.mrb[0].mxu0
        %v1260 = vadd.f32 %v1187, %v1259
        %v1261 = vpop.f32.mrb[0].mxu0
        %v1262 = vadd.f32 %v1189, %v1261
        %v1263 = vpop.f32.mrb[0].mxu0
        %v1264 = vadd.f32 %v1191, %v1263
        %v1265 = vpop.f32.mrb[0].mxu0
        %v1266 = vadd.f32 %v1193, %v1265
        %1267 = vdwg.mxu0
        %1268 = vmatprep.subr.bf16.mxu0 %v931
        %1269 = vmatpush1.bf16.msra.mxu0 %v930
        %1270 = vmatprep.subr.bf16.mxu0 %v933
        %1271 = vmatpush1.bf16.msra.mxu0 %v932
        %1272 = vmatprep.subr.bf16.mxu0 %v935
        %1273 = vmatpush1.bf16.msra.mxu0 %v934
        %1274 = vmatprep.subr.bf16.mxu0 %v937
        %1275 = vmatpush1.bf16.msra.mxu0 %v936
        %1276 = vmatprep.subr.bf16.mxu0 %v939
        %1277 = vmatpush1.bf16.msra.mxu0 %v938
        %1278 = vmatprep.subr.bf16.mxu0 %v941
        %1279 = vmatpush1.bf16.msra.mxu0 %v940
        %1280 = vmatprep.subr.bf16.mxu0 %v943
        %1281 = vmatpush1.bf16.msra.mxu0 %v942
        %1282 = vmatprep.subr.bf16.mxu0 %v945
        %1283 = vmatpush1.bf16.msra.mxu0 %v944
        %1284 = vmatprep.subr.bf16.mxu0 %v947
        %1285 = vmatpush1.bf16.msra.mxu0 %v946
        %1286 = vmatprep.subr.bf16.mxu0 %v949
        %1287 = vmatpush1.bf16.msra.mxu0 %v948
        %1288 = vmatprep.subr.bf16.mxu0 %v951
        %1289 = vmatpush1.bf16.msra.mxu0 %v950
        %1290 = vmatprep.subr.bf16.mxu0 %v953
        %1291 = vmatpush1.bf16.msra.mxu0 %v952
        %1292 = vmatprep.subr.bf16.mxu0 %v955
        %1293 = vmatpush1.bf16.msra.mxu0 %v954
        %1294 = vmatprep.subr.bf16.mxu0 %v957
        %1295 = vmatpush1.bf16.msra.mxu0 %v956
        %1296 = vmatprep.subr.bf16.mxu0 %v959
        %1297 = vmatpush1.bf16.msra.mxu0 %v958
        %1298 = vmatprep.subr.bf16.mxu0 %v961
        %1299 = vmatpush1.bf16.msra.mxu0 %v960
        %1300 = vmatprep.mubr.bf16.mxu0 %v315
        %1301 = vmatmul.mubr.bf16.gmra.mrb[0].mxu0 %v314
        %v1302 = vpop.f32.mrb[0].mxu0
        %v1303 = vadd.f32 %v1230, %v1302
        %v1304 = vpop.f32.mrb[0].mxu0
        %v1305 = vadd.f32 %v1232, %v1304
        %v1306 = vpop.f32.mrb[0].mxu0
        %v1307 = vadd.f32 %v1234, %v1306
        %v1308 = vpop.f32.mrb[0].mxu0
        %v1309 = vadd.f32 %v1236, %v1308
        %1310 = vmatprep.mubr.bf16.mxu0 %v323
        %1311 = vmatmul.mubr.bf16.gmra.mrb[0].mxu0 %v322
        %v1312 = vpop.f32.mrb[0].mxu0
        %v1313 = vadd.f32 %v1240, %v1312
        %v1314 = vpop.f32.mrb[0].mxu0
        %v1315 = vadd.f32 %v1242, %v1314
        %v1316 = vpop.f32.mrb[0].mxu0
        %v1317 = vadd.f32 %v1244, %v1316
        %v1318 = vpop.f32.mrb[0].mxu0
        %v1319 = vadd.f32 %v1246, %v1318
        %1320 = vmatprep.mubr.bf16.mxu0 %v331
        %1321 = vmatmul.mubr.bf16.gmra.mrb[0].mxu0 %v330
        %v1322 = vpop.f32.mrb[0].mxu0
        %v1323 = vadd.f32 %v1250, %v1322
        %v1324 = vpop.f32.mrb[0].mxu0
        %v1325 = vadd.f32 %v1252, %v1324
        %v1326 = vpop.f32.mrb[0].mxu0
        %v1327 = vadd.f32 %v1254, %v1326
        %v1328 = vpop.f32.mrb[0].mxu0
        %v1329 = vadd.f32 %v1256, %v1328
        %1330 = vmatprep.mubr.bf16.mxu0 %v339
        %1331 = vmatmul.mubr.bf16.gmra.mrb[0].mxu0 %v338
        %v1332 = vpop.f32.mrb[0].mxu0
        %v1333 = vadd.f32 %v1260, %v1332
        %v1334 = vpop.f32.mrb[0].mxu0
        %v1335 = vadd.f32 %v1262, %v1334
        %v1336 = vpop.f32.mrb[0].mxu0
        %v1337 = vadd.f32 %v1264, %v1336
        %v1338 = vpop.f32.mrb[0].mxu0
        %v1339 = vadd.f32 %v1266, %v1338
        %1340 = vdwg.mxu0
        %1341 = vmatprep.subr.bf16.mxu0 %v963
        %1342 = vmatpush1.bf16.msra.mxu0 %v962
        %1343 = vmatprep.subr.bf16.mxu0 %v965
        %1344 = vmatpush1.bf16.msra.mxu0 %v964
        %1345 = vmatprep.subr.bf16.mxu0 %v967
        %1346 = vmatpush1.bf16.msra.mxu0 %v966
        %1347 = vmatprep.subr.bf16.mxu0 %v969
        %1348 = vmatpush1.bf16.msra.mxu0 %v968
        %1349 = vmatprep.subr.bf16.mxu0 %v971
        %1350 = vmatpush1.bf16.msra.mxu0 %v970
        %1351 = vmatprep.subr.bf16.mxu0 %v973
        %1352 = vmatpush1.bf16.msra.mxu0 %v972
        %1353 = vmatprep.subr.bf16.mxu0 %v975
        %1354 = vmatpush1.bf16.msra.mxu0 %v974
        %1355 = vmatprep.subr.bf16.mxu0 %v977
        %1356 = vmatpush1.bf16.msra.mxu0 %v976
        %1357 = vmatprep.subr.bf16.mxu0 %v979
        %1358 = vmatpush1.bf16.msra.mxu0 %v978
        %1359 = vmatprep.subr.bf16.mxu0 %v981
        %1360 = vmatpush1.bf16.msra.mxu0 %v980
        %1361 = vmatprep.subr.bf16.mxu0 %v983
        %1362 = vmatpush1.bf16.msra.mxu0 %v982
        %1363 = vmatprep.subr.bf16.mxu0 %v985
        %1364 = vmatpush1.bf16.msra.mxu0 %v984
        %1365 = vmatprep.subr.bf16.mxu0 %v987
        %1366 = vmatpush1.bf16.msra.mxu0 %v986
        %1367 = vmatprep.subr.bf16.mxu0 %v989
        %1368 = vmatpush1.bf16.msra.mxu0 %v988
        %1369 = vmatprep.subr.bf16.mxu0 %v991
        %1370 = vmatpush1.bf16.msra.mxu0 %v990
        %1371 = vmatprep.subr.bf16.mxu0 %v993
        %1372 = vmatpush1.bf16.msra.mxu0 %v992
        %1373 = vmatprep.mubr.bf16.mxu0 %v317
        %1374 = vmatmul.mubr.bf16.gmra.mrb[0].mxu0 %v316
        %v1375 = vpop.f32.mrb[0].mxu0
        %v1376 = vadd.f32 %v1303, %v1375
        %v1377 = vpop.f32.mrb[0].mxu0
        %v1378 = vadd.f32 %v1305, %v1377
        %v1379 = vpop.f32.mrb[0].mxu0
        %v1380 = vadd.f32 %v1307, %v1379
        %v1381 = vpop.f32.mrb[0].mxu0
        %v1382 = vadd.f32 %v1309, %v1381
        %1383 = vmatprep.mubr.bf16.mxu0 %v325
        %1384 = vmatmul.mubr.bf16.gmra.mrb[0].mxu0 %v324
        %v1385 = vpop.f32.mrb[0].mxu0
        %v1386 = vadd.f32 %v1313, %v1385
        %v1387 = vpop.f32.mrb[0].mxu0
        %v1388 = vadd.f32 %v1315, %v1387
        %v1389 = vpop.f32.mrb[0].mxu0
        %v1390 = vadd.f32 %v1317, %v1389
        %v1391 = vpop.f32.mrb[0].mxu0
        %v1392 = vadd.f32 %v1319, %v1391
        %1393 = vmatprep.mubr.bf16.mxu0 %v333
        %1394 = vmatmul.mubr.bf16.gmra.mrb[0].mxu0 %v332
        %v1395 = vpop.f32.mrb[0].mxu0
        %v1396 = vadd.f32 %v1323, %v1395
        %v1397 = vpop.f32.mrb[0].mxu0
        %v1398 = vadd.f32 %v1325, %v1397
        %v1399 = vpop.f32.mrb[0].mxu0
        %v1400 = vadd.f32 %v1327, %v1399
        %v1401 = vpop.f32.mrb[0].mxu0
        %v1402 = vadd.f32 %v1329, %v1401
        %1403 = vmatprep.mubr.bf16.mxu0 %v341
        %1404 = vmatmul.mubr.bf16.gmra.mrb[0].mxu0 %v340
        %v1405 = vpop.f32.mrb[0].mxu0
        %v1406 = vadd.f32 %v1333, %v1405
        %v1407 = vpop.f32.mrb[0].mxu0
        %v1408 = vadd.f32 %v1335, %v1407
        %v1409 = vpop.f32.mrb[0].mxu0
        %v1410 = vadd.f32 %v1337, %v1409
        %v1411 = vpop.f32.mrb[0].mxu0
        %v1412 = vadd.f32 %v1339, %v1411
        %1413 = vdwg.mxu0
        %v1414 = vtanh.pop %v1376
        %v1415 = vtanh.pop %v1378
        %v1416 = vtanh.pop %v1380
        %v1417 = vtanh.pop %v1382
        %v1418 = vtanh.pop %v1386
        %v1419 = vtanh.pop %v1388
        %v1420 = vtanh.pop %v1390
        %v1421 = vtanh.pop %v1392
        %v1422 = vtanh.pop %v1396
        %v1423 = vtanh.pop %v1398
        %v1424 = vtanh.pop %v1400
        %v1425 = vtanh.pop %v1402
        %v1426 = vtanh.pop %v1406
        %v1427 = vtanh.pop %v1408
        %v1428 = vtanh.pop %v1410
        %v1429 = vtanh.pop %v1412
        %v1430 = vld [vmem:[%s3] sm:$0x3]
        %v1432 = vlaneseq
        %v1433 = vshrl.u32 %v1432, 7
        %v1434 = vsub.s32 0, %v1433
        %v1435 = vrot.slane %v1430, %v1434
        %v1436 = vlaneseq
        %v1437 = vshrl.u32 %v1436, 7
        %v1438 = vsub.s32 1, %v1437
        %v1439 = vrot.slane %v1430, %v1438
        %v1442 = vmul.f32 %v1414, %v1435
        %v1443 = vmul.f32 %v1415, %v1439
        %v1444 = vmul.f32 %v1416, %v1435
        %v1445 = vmul.f32 %v1417, %v1439
        %v1446 = vmul.f32 %v1418, %v1435
        %v1447 = vmul.f32 %v1419, %v1439
        %v1448 = vmul.f32 %v1420, %v1435
        %v1449 = vmul.f32 %v1421, %v1439
        %v1450 = vmul.f32 %v1422, %v1435
        %v1451 = vmul.f32 %v1423, %v1439
        %v1452 = vmul.f32 %v1424, %v1435
        %v1453 = vmul.f32 %v1425, %v1439
        %v1454 = vmul.f32 %v1426, %v1435
        %v1455 = vmul.f32 %v1427, %v1439
        %v1456 = vmul.f32 %v1428, %v1435
        %v1457 = vmul.f32 %v1429, %v1439
        %v1458 = vadd.f32 %v1442, %v1443
        %1459 = vadd.xlane.f32.xlu0 %v1458
        %v1460 = vpop.xlane.xlu0 %1459
        %v1461 = vadd.f32 %v1444, %v1445
        %1462 = vadd.xlane.f32.xlu0 %v1461
        %v1463 = vpop.xlane.xlu0 %1462
        %v1464 = vadd.f32 %v1446, %v1447
        %1465 = vadd.xlane.f32.xlu0 %v1464
        %v1466 = vpop.xlane.xlu0 %1465
        %v1467 = vadd.f32 %v1448, %v1449
        %1468 = vadd.xlane.f32.xlu0 %v1467
        %v1469 = vpop.xlane.xlu0 %1468
        %v1470 = vadd.f32 %v1450, %v1451
        %1471 = vadd.xlane.f32.xlu0 %v1470
        %v1472 = vpop.xlane.xlu0 %1471
        %v1473 = vadd.f32 %v1452, %v1453
        %1474 = vadd.xlane.f32.xlu0 %v1473
        %v1475 = vpop.xlane.xlu0 %1474
        %v1476 = vadd.f32 %v1454, %v1455
        %1477 = vadd.xlane.f32.xlu0 %v1476
        %v1478 = vpop.xlane.xlu0 %1477
        %v1479 = vadd.f32 %v1456, %v1457
        %1480 = vadd.xlane.f32.xlu0 %v1479
        %v1481 = vpop.xlane.xlu0 %1480
        %vm1482 = vcmask 7168
        %1483 = vst.msk [vmem:[%s234] sm:$0xff] %vm1482, %v1460
        %1484 = vst.msk [vmem:[%s234 + $0x8] sm:$0xff] %vm1482, %v1463
        %1485 = vst.msk [vmem:[%s234 + $0x10] sm:$0xff] %vm1482, %v1466
        %1486 = vst.msk [vmem:[%s234 + $0x18] sm:$0xff] %vm1482, %v1469
        %1487 = vst.msk [vmem:[%s234 + $0x20] sm:$0xff] %vm1482, %v1472
        %1488 = vst.msk [vmem:[%s234 + $0x28] sm:$0xff] %vm1482, %v1475
        %1489 = vst.msk [vmem:[%s234 + $0x30] sm:$0xff] %vm1482, %v1478
        %1490 = vst.msk [vmem:[%s234 + $0x38] sm:$0xff] %vm1482, %v1481
        %s1491 = sand.u32 %s116, 1
        %s1492 = sand.u32 %s116, 1
        %s1493 = smul.addr %s1492, 64
        %s1494 = scalar_lea.vmem [#allocation6], %s1493
        // Predicated region
        $region45: #{tpu_custom_call.1} parent=35 // pred_check
          %p1495 = pneg %p126
        $region46: #{tpu_custom_call.1} parent=35 // pred_check_branch
          %1497 = sbr.rel (%p1495) target = $region48
        $region47: #{tpu_custom_call.1} parent=35 // pred_region
          %s1498 = smul.u32 8, %s19
          %s1499 = ssub.s32 13, %s1498
          %p1500 = scmp.lt.s32.totalorder %s1499, 8
          %s1501 = scalar_select %p1500, %s1499, 8
          %s1502 = smul.u32 128, %s1501
          %p1503 = scmp.ne.s32.totalorder 0, %s1502
          %s1504 = smul.addr %s1498, 8
          %s1505 = scalar_lea.vmem %s4, %s1504
          // Predicated region
          $region49: #{tpu_custom_call.1} parent=47 // pred_check
            %p1506 = pneg %p1503
          $region50: #{tpu_custom_call.1} parent=47 // pred_check_branch
            %1508 = sbr.rel (%p1506) target = $region52
          $region51: #{tpu_custom_call.1} parent=47 // pred_region
            // Predicated region
            $region53: #{tpu_custom_call.1} parent=51 // pred_check
              _
            $region54: #{tpu_custom_call.1} parent=51 // pred_check_branch
              %1510 = sbr.rel (0) target = $region56
            $region55: #{tpu_custom_call.1} parent=51 // pred_region
              // Predicated region
              $region75: #{tpu_custom_call.1} parent=55 // pred_check
                _
              $region76: #{tpu_custom_call.1} parent=55 // pred_check_branch
                %1573 = sbr.rel (0) target = $region78
              $region77: #{tpu_custom_call.1} parent=55 // pred_region
                %s1574 = sshrl.u32 %s1501, 3
                // While loop
                $region79: #{tpu_custom_call.1} parent=77 // loop_pre_header
                  _
                $region80: #{tpu_custom_call.1} parent=77 // loop_header
                  %s1576 = sphi 0, %s1578
                  %p1577 = scmp.ge.s32.totalorder %s1576, %s1574
                  %s1581 = sphi 0, %s1602
                  %s1582 = sphi %s1494, %s1605
                  %s1583 = sphi %s1505, %s1606
                $region81: #{tpu_custom_call.1} parent=77 // loop_header_branch
                  %1580 = sbr.rel (%p1577) target = $region85
                $region82: #{tpu_custom_call.1} parent=77 // loop_body
                  %v1584 = vld [vmem:[%s1582] sm:$0xff]
                  %1585 = vst [vmem:[%s1583] sm:$0xff] %v1584
                  %v1586 = vld [vmem:[%s1582 + $0x8] sm:$0xff]
                  %1587 = vst [vmem:[%s1583 + $0x8] sm:$0xff] %v1586
                  %v1588 = vld [vmem:[%s1582 + $0x10] sm:$0xff]
                  %1589 = vst [vmem:[%s1583 + $0x10] sm:$0xff] %v1588
                  %v1590 = vld [vmem:[%s1582 + $0x18] sm:$0xff]
                  %1591 = vst [vmem:[%s1583 + $0x18] sm:$0xff] %v1590
                  %v1592 = vld [vmem:[%s1582 + $0x20] sm:$0xff]
                  %1593 = vst [vmem:[%s1583 + $0x20] sm:$0xff] %v1592
                  %v1594 = vld [vmem:[%s1582 + $0x28] sm:$0xff]
                  %1595 = vst [vmem:[%s1583 + $0x28] sm:$0xff] %v1594
                  %v1596 = vld [vmem:[%s1582 + $0x30] sm:$0xff]
                  %1597 = vst [vmem:[%s1583 + $0x30] sm:$0xff] %v1596
                  %v1598 = vld [vmem:[%s1582 + $0x38] sm:$0xff]
                  %1599 = vst [vmem:[%s1583 + $0x38] sm:$0xff] %v1598
                  %s1600 = sadd.s32 1, %s1581
                  %p1601 = scmp.ge.s32.totalorder %s1600, %s1574
                  %s1602 = scalar_select %p1601, 0, %s1600
                  %s1603 = smul.u32 %s1602, 64
                  %s1604 = smul.u32 %s1602, 64
                  %s1605 = scalar_lea.vmem %s1494, %s1603 [#allocation6]
                  %s1606 = scalar_lea.vmem %s1505, %s1604
                $region83: #{tpu_custom_call.1} parent=77 // loop_footer
                  %s1578 = sadd.s32 %s1576, 1
                $region84: #{tpu_custom_call.1} parent=77 // loop_footer_branch
                  %1575 = sbr.rel target = $region80
                $region85: #{tpu_custom_call.1} parent=77 // loop_exit
                  _
                %s1607 = sshrl.u32 %s1501, 3
                %s1608 = sand.u32 %s1501, 7
                %s1609 = smul.u32 %s1607, 8
                %s1610 = smul.u32 8, %s1609
                %s1611 = scalar_lea.vmem %s1494, %s1610 [#allocation6]
                %s1612 = smul.u32 8, %s1609
                %s1613 = scalar_lea.vmem %s1505, %s1612
                // While loop
                $region86: #{tpu_custom_call.1} parent=77 // loop_pre_header
                  _
                $region87: #{tpu_custom_call.1} parent=77 // loop_header
                  %s1615 = sphi 0, %s1617
                  %p1616 = scmp.ge.s32.totalorder %s1615, %s1608
                  %s1620 = sphi 0, %s1627
                  %s1621 = sphi %s1611, %s1630
                  %s1622 = sphi %s1613, %s1631
                $region88: #{tpu_custom_call.1} parent=77 // loop_header_branch
                  %1619 = sbr.rel (%p1616) target = $region92
                $region89: #{tpu_custom_call.1} parent=77 // loop_body
                  %v1623 = vld [vmem:[%s1621] sm:$0xff]
                  %1624 = vst [vmem:[%s1622] sm:$0xff] %v1623
                  %s1625 = sadd.s32 1, %s1620
                  %p1626 = scmp.ge.s32.totalorder %s1625, %s1608
                  %s1627 = scalar_select %p1626, 0, %s1625
                  %s1628 = smul.u32 %s1627, 8
                  %s1629 = smul.u32 %s1627, 8
                  %s1630 = scalar_lea.vmem %s1611, %s1628 [#allocation6]
                  %s1631 = scalar_lea.vmem %s1613, %s1629
                $region90: #{tpu_custom_call.1} parent=77 // loop_footer
                  %s1617 = sadd.s32 %s1615, 1
                $region91: #{tpu_custom_call.1} parent=77 // loop_footer_branch
                  %1614 = sbr.rel target = $region87
                $region92: #{tpu_custom_call.1} parent=77 // loop_exit
                  _
              $region78: #{tpu_custom_call.1} parent=55 // pred_fallthru
                _
              // Predicated region
              $region93: #{tpu_custom_call.1} parent=55 // pred_check
                _
              $region94: #{tpu_custom_call.1} parent=55 // pred_check_branch
                %1633 = sbr.rel target = $region96
              $region95: #{tpu_custom_call.1} parent=55 // pred_region
                _
              $region96: #{tpu_custom_call.1} parent=55 // pred_fallthru
                _
            $region56: #{tpu_custom_call.1} parent=51 // pred_fallthru
              _
            // Predicated region
            $region57: #{tpu_custom_call.1} parent=51 // pred_check
              _
            $region58: #{tpu_custom_call.1} parent=51 // pred_check_branch
              %1512 = sbr.rel target = $region60
            $region59: #{tpu_custom_call.1} parent=51 // pred_region
              %s1514 = sshrl.u32 %s1501, 3
              // While loop
              $region61: #{tpu_custom_call.1} parent=59 // loop_pre_header
                _
              $region62: #{tpu_custom_call.1} parent=59 // loop_header
                %s1516 = sphi 0, %s1518
                %p1517 = scmp.ge.s32.totalorder %s1516, %s1514
                %s1521 = sphi 0, %s1542
                %s1522 = sphi %s1494, %s1545
                %s1523 = sphi %s1505, %s1546
              $region63: #{tpu_custom_call.1} parent=59 // loop_header_branch
                %1520 = sbr.rel (%p1517) target = $region67
              $region64: #{tpu_custom_call.1} parent=59 // loop_body
                %v1524 = vld [vmem:[%s1522] sm:$0xff]
                %1525 = vst [vmem:[%s1523] sm:$0xff] %v1524
                %v1526 = vld [vmem:[%s1522 + $0x8] sm:$0xff]
                %1527 = vst [vmem:[%s1523 + $0x8] sm:$0xff] %v1526
                %v1528 = vld [vmem:[%s1522 + $0x10] sm:$0xff]
                %1529 = vst [vmem:[%s1523 + $0x10] sm:$0xff] %v1528
                %v1530 = vld [vmem:[%s1522 + $0x18] sm:$0xff]
                %1531 = vst [vmem:[%s1523 + $0x18] sm:$0xff] %v1530
                %v1532 = vld [vmem:[%s1522 + $0x20] sm:$0xff]
                %1533 = vst [vmem:[%s1523 + $0x20] sm:$0xff] %v1532
                %v1534 = vld [vmem:[%s1522 + $0x28] sm:$0xff]
                %1535 = vst [vmem:[%s1523 + $0x28] sm:$0xff] %v1534
                %v1536 = vld [vmem:[%s1522 + $0x30] sm:$0xff]
                %1537 = vst [vmem:[%s1523 + $0x30] sm:$0xff] %v1536
                %v1538 = vld [vmem:[%s1522 + $0x38] sm:$0xff]
                %1539 = vst [vmem:[%s1523 + $0x38] sm:$0xff] %v1538
                %s1540 = sadd.s32 1, %s1521
                %p1541 = scmp.ge.s32.totalorder %s1540, %s1514
                %s1542 = scalar_select %p1541, 0, %s1540
                %s1543 = smul.u32 %s1542, 64
                %s1544 = smul.u32 %s1542, 64
                %s1545 = scalar_lea.vmem %s1494, %s1543 [#allocation6]
                %s1546 = scalar_lea.vmem %s1505, %s1544
              $region65: #{tpu_custom_call.1} parent=59 // loop_footer
                %s1518 = sadd.s32 %s1516, 1
              $region66: #{tpu_custom_call.1} parent=59 // loop_footer_branch
                %1515 = sbr.rel target = $region62
              $region67: #{tpu_custom_call.1} parent=59 // loop_exit
                _
              %s1547 = sshrl.u32 %s1501, 3
              %s1548 = sand.u32 %s1501, 7
              %s1549 = smul.u32 %s1547, 8
              %s1550 = smul.u32 8, %s1549
              %s1551 = scalar_lea.vmem %s1494, %s1550 [#allocation6]
              %s1552 = smul.u32 8, %s1549
              %s1553 = scalar_lea.vmem %s1505, %s1552
              // While loop
              $region68: #{tpu_custom_call.1} parent=59 // loop_pre_header
                _
              $region69: #{tpu_custom_call.1} parent=59 // loop_header
                %s1555 = sphi 0, %s1557
                %p1556 = scmp.ge.s32.totalorder %s1555, %s1548
                %s1560 = sphi 0, %s1567
                %s1561 = sphi %s1551, %s1570
                %s1562 = sphi %s1553, %s1571
              $region70: #{tpu_custom_call.1} parent=59 // loop_header_branch
                %1559 = sbr.rel (%p1556) target = $region74
              $region71: #{tpu_custom_call.1} parent=59 // loop_body
                %v1563 = vld [vmem:[%s1561] sm:$0xff]
                %1564 = vst [vmem:[%s1562] sm:$0xff] %v1563
                %s1565 = sadd.s32 1, %s1560
                %p1566 = scmp.ge.s32.totalorder %s1565, %s1548
                %s1567 = scalar_select %p1566, 0, %s1565
                %s1568 = smul.u32 %s1567, 8
                %s1569 = smul.u32 %s1567, 8
                %s1570 = scalar_lea.vmem %s1551, %s1568 [#allocation6]
                %s1571 = scalar_lea.vmem %s1553, %s1569
              $region72: #{tpu_custom_call.1} parent=59 // loop_footer
                %s1557 = sadd.s32 %s1555, 1
              $region73: #{tpu_custom_call.1} parent=59 // loop_footer_branch
                %1554 = sbr.rel target = $region69
              $region74: #{tpu_custom_call.1} parent=59 // loop_exit
                _
            $region60: #{tpu_custom_call.1} parent=51 // pred_fallthru
              _
          $region52: #{tpu_custom_call.1} parent=47 // pred_fallthru
            _
          %1634 = vnop
        $region48: #{tpu_custom_call.1} parent=35 // pred_fallthru
          _
      $region36: #{tpu_custom_call.1} parent=5 // pred_fallthru
        _
      %p1635 = scmp.le.s32.totalorder 2, %s14
      // Predicated region
      $region97: #{tpu_custom_call.1} parent=5 // pred_check
        %p1636 = pneg %p1635
      $region98: #{tpu_custom_call.1} parent=5 // pred_check_branch
        %1638 = sbr.rel (%p1636) target = $region100
      $region99: #{tpu_custom_call.1} parent=5 // pred_region
        %s1639 = ssub.s32 %s14, 2
        // Predicated region
        $region101: #{tpu_custom_call.1} parent=99 // pred_check
          %p1640 = pneg %p132
        $region102: #{tpu_custom_call.1} parent=99 // pred_check_branch
          %1642 = sbr.rel (%p1640) target = $region104
        $region103: #{tpu_custom_call.1} parent=99 // pred_region
          %s1643 = sand.u32 %s117, 1
          %s1644 = sand.u32 %s117, 1
          %s1645 = smul.addr %s1644, 64
          %s1646 = scalar_lea.vmem [#allocation6], %s1645
        $region104: #{tpu_custom_call.1} parent=99 // pred_fallthru
          _
      $region100: #{tpu_custom_call.1} parent=5 // pred_fallthru
        _
    $region6: #{tpu_custom_call.1} parent=1 // loop_footer
      %s18 = sadd.s32 1, %s14
    $region7: #{tpu_custom_call.1} parent=1 // loop_footer_branch
      %13 = sbr.rel target = $region3
    $region8: #{tpu_custom_call.1} parent=1 // loop_exit
      _
    %1647 = vsyncpa [#allocation3], 1
    %s1648 = scalar_lea.sflag [#allocation3], 1
    %1649 = vsyncpa %s1648, 1
    %1650 = vsyncpa [#allocation5], 1

</llo_original>
